<compile_context>
chip_gen: v7x
topology: tpu7x:2x2x1
jax: 0.10.0
libtpu: 0.0.40
codegen_flags: <defaults>
</compile_context>

<pallas_src>
import functools

import jax
import jax.numpy as jnp
from jax.experimental import pallas as pl
from jax.experimental.pallas import tpu as pltpu


IN_FEATURES = 122
N_HIDDEN = 4          # hidden ReLU layers after the first one, per head
POLICY_OUT = 23
VALUE_LANE = 23       # lane carrying tanh(value) in the fused output tile


# ----------------------------------------------------------------------------
# Kernels
# ----------------------------------------------------------------------------
def _pad_features(x_ref, xpad_ref):
    """Zero-pad the (bt,122) input tile to (bt,128) in VMEM (K-pad 122->128).

    Re-zeroed every grid step: scratch is per-core under megacore sharding, so
    a program_id()==0 one-shot init would be unsafe with "parallel" semantics.
    """
    xpad_ref[...] = jnp.zeros_like(xpad_ref)
    xpad_ref[:, :IN_FEATURES] = x_ref[...]
    return xpad_ref[...]


def _finalize(z, out_ref):
    """cols 0..22 = policy logits, col 23 = tanh(value); other lanes are zero."""
    lane = jax.lax.broadcasted_iota(jnp.int32, z.shape, 1)
    out_ref[...] = jnp.where(lane == VALUE_LANE, jnp.tanh(z), z)


def _mlp_wide_kernel(compute_dtype,
                     x_ref, w0_ref, b0_ref, wh_ref, bh_ref, wf_ref, bf_ref,
                     out_ref, xpad_ref):
    """v6e/v7x layout: single (bt,256) activation, block-diagonal hidden weights."""
    h = _pad_features(x_ref, xpad_ref).astype(compute_dtype)          # (bt,128)
    z = jnp.dot(h, w0_ref[...], preferred_element_type=jnp.float32) + b0_ref[...]
    h = jnp.maximum(z, 0.0)                                            # (bt,256)
    for i in range(N_HIDDEN):
        z = jnp.dot(h.astype(compute_dtype), wh_ref[i],
                    preferred_element_type=jnp.float32) + bh_ref[i]
        h = jnp.maximum(z, 0.0)
    z = jnp.dot(h.astype(compute_dtype), wf_ref[...],
                preferred_element_type=jnp.float32) + bf_ref[...]      # (bt,128)
    _finalize(z, out_ref)


def _mlp_narrow_kernel(compute_dtype,
                       x_ref, w0_ref, b0_ref, pwh_ref, pbh_ref, vwh_ref, vbh_ref,
                       wf_ref, bf_ref, out_ref, xpad_ref):
    """v5e layout: two interleaved 128-wide chains (matches 4x128^2 MXUs)."""
    h = _pad_features(x_ref, xpad_ref).astype(compute_dtype)          # (bt,128)
    z = jnp.dot(h, w0_ref[...], preferred_element_type=jnp.float32) + b0_ref[...]
    h0 = jnp.maximum(z, 0.0)                                           # (bt,256)
    h_p = h0[:, :128]
    h_v = h0[:, 128:]
    for i in range(N_HIDDEN):
        zp = jnp.dot(h_p.astype(compute_dtype), pwh_ref[i],
                     preferred_element_type=jnp.float32) + pbh_ref[i]
        zv = jnp.dot(h_v.astype(compute_dtype), vwh_ref[i],
                     preferred_element_type=jnp.float32) + vbh_ref[i]
        h_p = jnp.maximum(zp, 0.0)
        h_v = jnp.maximum(zv, 0.0)
    h = jnp.concatenate([h_p, h_v], axis=-1)                           # (bt,256)
    z = jnp.dot(h.astype(compute_dtype), wf_ref[...],
                preferred_element_type=jnp.float32) + bf_ref[...]      # (bt,128)
    _finalize(z, out_ref)


# ----------------------------------------------------------------------------
# Wrapper
# ----------------------------------------------------------------------------
def _round_up(n, m):
    return ((n + m - 1) // m) * m


def _const_spec(a):
    nd = a.ndim
    return pl.BlockSpec(a.shape, lambda i: (0,) * nd)   # VMEM-resident constant


@functools.partial(jax.jit, static_argnames=("wide", "compute_dtype", "b_tile"))
def neural_network2_forward(x, packed_params, *, wide, compute_dtype=jnp.float32,
                            b_tile=512):
    """x: [B,122] float32.  Returns (value [B,1], policy [B,23])."""
    B = x.shape[0]
    Bp = _round_up(B, 8)                        # pad batch only to a sublane group
    bt_cap = max(8, _round_up(int(b_tile), 8))  # user tile, forced to % 8 == 0
    n_steps = pl.cdiv(Bp, min(bt_cap, Bp))
    if Bp >= 16:
        n_steps = max(n_steps, 2)               # keep both v7x TensorCores busy
    bt = _round_up(pl.cdiv(Bp, n_steps), 8)     # balanced tile, % 8 == 0
    grid = (pl.cdiv(Bp, bt),)                   # last block may be ragged (masked)

    if Bp != B:
        x = jnp.pad(x, ((0, Bp - B), (0, 0)))   # <= 7 zero rows; no feature pad

    kernel = functools.partial(_mlp_wide_kernel if wide else _mlp_narrow_kernel,
                               compute_dtype)

    weight_elems = sum(int(a.size) for a in packed_params
                       if a.ndim >= 2 and a.shape[-2] > 1)
    param_bytes = sum(int(a.size) * a.dtype.itemsize for a in packed_params)

    out = pl.pallas_call(
        kernel,
        out_shape=jax.ShapeDtypeStruct((Bp, 128), jnp.float32),
        grid=grid,
        in_specs=[pl.BlockSpec((bt, IN_FEATURES), lambda i: (i, 0))]
                 + [_const_spec(a) for a in packed_params],
        out_specs=pl.BlockSpec((bt, 128), lambda i: (i, 0)),
        scratch_shapes=[pltpu.VMEM((bt, 128), jnp.float32)],
        compiler_params=pltpu.CompilerParams(
            dimension_semantics=("parallel",),
        ),
        cost_estimate=pl.CostEstimate(
            flops=2 * weight_elems * Bp,
            transcendentals=128 * Bp,
            bytes_accessed=param_bytes + 4 * Bp * (IN_FEATURES + 128),
        ),
    )(x, *packed_params)

    policy = out[:B, :POLICY_OUT]
    value = out[:B, VALUE_LANE:VALUE_LANE + 1]
    return value, policy


def auto_config():
    """Pick (wide_packing, compute_dtype) for the local TPU generation."""
    try:
        kind = jax.devices()[0].device_kind.lower()
    except Exception:
        kind = ""
    modern_mxu = any(tag in kind for tag in ("v6", "v7", "7x"))  # 256x256 MXU
    return modern_mxu, (jnp.bfloat16 if modern_mxu else jnp.float32)


# ----------------------------------------------------------------------------
# Parameter packing (once, outside the per-call path).
# Weights stored as (in, out) = transpose of PyTorch (out, in); biases (1, out).
# All padded regions are exactly zero, which makes the lane-23 tanh merge exact.
# ----------------------------------------------------------------------------
def pack_params(policy_params, value_params, *, wide, weight_dtype=jnp.float32):
    f32 = jnp.float32
    pw = [w for w, _ in policy_params]
    pb = [b for _, b in policy_params]
    vw = [w for w, _ in value_params]
    vb = [b for _, b in value_params]

    # Fused first layer, K padded 122->128, cols [policy | value].
    w0 = jnp.zeros((128, 256), f32).at[:IN_FEATURES, :128].set(pw[0])
    w0 = w0.at[:IN_FEATURES, 128:].set(vw[0])
    b0 = jnp.concatenate([pb[0], vb[0]], axis=-1)                   # (1,256)

    # Fused final layer: rows 0..127 (policy h) -> cols 0..22,
    # rows 128..191 (value h, 64 units) -> col 23, everything else zero.
    wf = jnp.zeros((256, 128), f32).at[:128, :POLICY_OUT].set(pw[5])
    wf = wf.at[128:192, VALUE_LANE:VALUE_LANE + 1].set(vw[5])
    bf = jnp.zeros((1, 128), f32).at[:, :POLICY_OUT].set(pb[5])
    bf = bf.at[:, VALUE_LANE:VALUE_LANE + 1].set(vb[5])

    if wide:
        # Block-diagonal (4,256,256) hidden weights: policy top-left,
        # value bottom-right (last value layer 128->64 lane-padded).
        wh = jnp.zeros((4, 256, 256), f32)
        bh = jnp.zeros((4, 1, 256), f32)
        for i in range(4):
            wh = wh.at[i, :128, :128].set(pw[i + 1])
            bh = bh.at[i, :, :128].set(pb[i + 1])
        for i in range(3):
            wh = wh.at[i, 128:, 128:].set(vw[i + 1])
            bh = bh.at[i, :, 128:].set(vb[i + 1])
        wh = wh.at[3, 128:, 128:192].set(vw[4])
        bh = bh.at[3, :, 128:192].set(vb[4])
        return (w0.astype(weight_dtype), b0,
                wh.astype(weight_dtype), bh,
                wf.astype(weight_dtype), bf)

    # Narrow (v5e) layout: per-head (4,128,128) stacks.
    pwh = jnp.stack(pw[1:5])                                        # (4,128,128)
    pbh = jnp.stack(pb[1:5])                                        # (4,1,128)
    vw4 = jnp.zeros((128, 128), f32).at[:, :64].set(vw[4])
    vb4 = jnp.zeros((1, 128), f32).at[:, :64].set(vb[4])
    vwh = jnp.stack(list(vw[1:4]) + [vw4])                          # (4,128,128)
    vbh = jnp.stack(list(vb[1:4]) + [vb4])                          # (4,1,128)
    return (w0.astype(weight_dtype), b0,
            pwh.astype(weight_dtype), pbh,
            vwh.astype(weight_dtype), vbh,
            wf.astype(weight_dtype), bf)


# ----------------------------------------------------------------------------
# Deterministic parameter init (PyTorch nn.Linear default: U(+-1/sqrt(fan_in)))
# ----------------------------------------------------------------------------
def init_linear(key, fan_in, fan_out):
    kw, kb = jax.random.split(key)
    bound = 1.0 / (fan_in ** 0.5)
    w = jax.random.uniform(kw, (fan_in, fan_out), jnp.float32, -bound, bound)
    b = jax.random.uniform(kb, (1, fan_out), jnp.float32, -bound, bound)
    return w, b


def init_params(key):
    policy_dims = [(122, 128), (128, 128), (128, 128), (128, 128), (128, 128), (128, 23)]
    value_dims = [(122, 128), (128, 128), (128, 128), (128, 128), (128, 64), (64, 1)]
    keys = jax.random.split(key, len(policy_dims) + len(value_dims))
    policy_params = [init_linear(k, fi, fo)
                     for k, (fi, fo) in zip(keys[:len(policy_dims)], policy_dims)]
    value_params = [init_linear(k, fi, fo)
                    for k, (fi, fo) in zip(keys[len(policy_dims):], value_dims)]
    return policy_params, value_params


# ----------------------------------------------------------------------------
# Pure-JAX reference (true-f32 matmuls) for correctness check
# ----------------------------------------------------------------------------
def reference_forward(x, policy_params, value_params):
    hp = jax.lax.Precision.HIGHEST

    def head(h, params, final_act):
        for w, b in params[:-1]:
            h = jnp.maximum(jnp.dot(h, w, precision=hp) + b, 0.0)
        w, b = params[-1]
        return final_act(jnp.dot(h, w, precision=hp) + b)

    policy = head(x, policy_params, lambda z: z)
    value = head(x, value_params, jnp.tanh)
    return value, policy


if __name__ == "__main__":
    key = jax.random.PRNGKey(0)
    k_params, k_x = jax.random.split(key)

    policy_params, value_params = init_params(k_params)

    B = 8
    x = jax.random.normal(k_x, (B, 122), dtype=jnp.float32)
    value_ref, policy_ref = reference_forward(x, policy_params, value_params)

    # 1) Chip-auto optimized config (block-diag 256-wide + bf16 on v6e/v7x,
    #    128-wide f32 on v5e & older).
    wide, cdt = auto_config()
    packed = pack_params(policy_params, value_params, wide=wide, weight_dtype=cdt)
    value, policy = neural_network2_forward(x, packed, wide=wide, compute_dtype=cdt)
    value, policy = jax.block_until_ready((value, policy))
    assert value.shape == (B, 1) and policy.shape == (B, 23)
    tol = 1e-5 if cdt == jnp.float32 else 5e-2   # bf16 MXU inputs -> looser parity
    assert jnp.allclose(policy, policy_ref, atol=tol, rtol=tol)
    assert jnp.allclose(value, value_ref, atol=tol, rtol=tol)

    # 2) Strict f32 parity path (also exactly what a v5e would run).
    if wide or cdt != jnp.float32:
        packed32 = pack_params(policy_params, value_params, wide=False,
                               weight_dtype=jnp.float32)
        v32, p32 = neural_network2_forward(x, packed32, wide=False,
                                           compute_dtype=jnp.float32)
        v32, p32 = jax.block_until_ready((v32, p32))
        assert jnp.allclose(p32, policy_ref, atol=1e-5, rtol=1e-5)
        assert jnp.allclose(v32, value_ref, atol=1e-5, rtol=1e-5)

    print("KERNEL_OK")
</pallas_src>

<mosaic_0001>
module attributes {stable_mosaic.version = 11 : i64} {
  func.func @_mlp_narrow_kernel(%arg0: i32, %arg1: memref<8x122xf32, #tpu.memory_space<vmem>>, %arg2: memref<128x256xf32, #tpu.memory_space<vmem>>, %arg3: memref<1x256xf32, #tpu.memory_space<vmem>>, %arg4: memref<4x128x128xf32, #tpu.memory_space<vmem>>, %arg5: memref<4x1x128xf32, #tpu.memory_space<vmem>>, %arg6: memref<4x128x128xf32, #tpu.memory_space<vmem>>, %arg7: memref<4x1x128xf32, #tpu.memory_space<vmem>>, %arg8: memref<256x128xf32, #tpu.memory_space<vmem>>, %arg9: memref<1x128xf32, #tpu.memory_space<vmem>>, %arg10: memref<8x128xf32, #tpu.memory_space<vmem>>, %arg11: memref<8x128xf32, #tpu.memory_space<vmem>>) attributes {dimension_semantics = [#tpu.dimension_semantics<parallel>], iteration_bounds = array<i64: 1>, scalar_prefetch = 0 : i64, scratch_operands = 1 : i64, tpu.core_type = #tpu.core_type<tc>, window_params = [{transform_indices = @transform_0, window_bounds = array<i64: 8, 122>}, {pipeline_mode = #tpu.pipeline_mode<synchronous>, transform_indices = @transform_1, window_bounds = array<i64: 128, 256>}, {pipeline_mode = #tpu.pipeline_mode<synchronous>, transform_indices = @transform_2, window_bounds = array<i64: 1, 256>}, {pipeline_mode = #tpu.pipeline_mode<synchronous>, transform_indices = @transform_3, window_bounds = array<i64: 4, 128, 128>}, {pipeline_mode = #tpu.pipeline_mode<synchronous>, transform_indices = @transform_4, window_bounds = array<i64: 4, 1, 128>}, {pipeline_mode = #tpu.pipeline_mode<synchronous>, transform_indices = @transform_5, window_bounds = array<i64: 4, 128, 128>}, {pipeline_mode = #tpu.pipeline_mode<synchronous>, transform_indices = @transform_6, window_bounds = array<i64: 4, 1, 128>}, {pipeline_mode = #tpu.pipeline_mode<synchronous>, transform_indices = @transform_7, window_bounds = array<i64: 256, 128>}, {pipeline_mode = #tpu.pipeline_mode<synchronous>, transform_indices = @transform_8, window_bounds = array<i64: 1, 128>}, {transform_indices = @transform_9, window_bounds = array<i64: 8, 128>}]} {
    %cst = arith.constant 0.000000e+00 : f32
    %0 = vector.broadcast %cst : f32 to vector<8x128xf32>
    %c0 = arith.constant 0 : index
    %c0_0 = arith.constant 0 : index
    %1 = vector.load %arg11[%c0, %c0_0] : memref<8x128xf32, #tpu.memory_space<vmem>>, vector<8x128xf32>
    tpu.vector_store %arg11[%c0, %c0_0], %0 {strides = array<i32>} : memref<8x128xf32, #tpu.memory_space<vmem>>, vector<8x128xf32>,
    %c0_1 = arith.constant 0 : index
    %c0_2 = arith.constant 0 : index
    %2 = vector.load %arg1[%c0_1, %c0_2] : memref<8x122xf32, #tpu.memory_space<vmem>>, vector<8x122xf32>
    %c0_3 = arith.constant 0 : index
    %c0_4 = arith.constant 0 : index
    %3 = vector.load %arg11[%c0_3, %c0_4] : memref<8x128xf32, #tpu.memory_space<vmem>>, vector<8x122xf32>
    tpu.vector_store %arg11[%c0_3, %c0_4], %2 {strides = array<i32>} : memref<8x128xf32, #tpu.memory_space<vmem>>, vector<8x122xf32>,
    %c0_5 = arith.constant 0 : index
    %c0_6 = arith.constant 0 : index
    %4 = vector.load %arg11[%c0_5, %c0_6] : memref<8x128xf32, #tpu.memory_space<vmem>>, vector<8x128xf32>
    %c0_7 = arith.constant 0 : index
    %c0_8 = arith.constant 0 : index
    %5 = vector.load %arg2[%c0_7, %c0_8] : memref<128x256xf32, #tpu.memory_space<vmem>>, vector<128x256xf32>
    %cst_9 = arith.constant dense<0.000000e+00> : vector<8x256xf32>
    %6 = tpu.matmul %4, %5, %cst_9 {dimension_numbers = #tpu.dot_dimension_numbers<[1], [0], [0], [1], [0, 0, 1, 1], [], []>} : vector<8x128xf32>, vector<128x256xf32>, vector<8x256xf32> -> vector<8x256xf32>
    %c0_10 = arith.constant 0 : index
    %c0_11 = arith.constant 0 : index
    %7 = vector.load %arg3[%c0_10, %c0_11] : memref<1x256xf32, #tpu.memory_space<vmem>>, vector<1x256xf32>
    %8 = vector.broadcast %7 : vector<1x256xf32> to vector<8x256xf32>
    %9 = arith.addf %6, %8 : vector<8x256xf32>
    %cst_12 = arith.constant 0.000000e+00 : f32
    %10 = vector.broadcast %cst_12 : f32 to vector<8x256xf32>
    %11 = arith.maximumf %9, %10 : vector<8x256xf32>
    %12 = vector.extract_strided_slice %11 {offsets = [0, 0], sizes = [8, 128], strides = [1, 1]} : vector<8x256xf32> to vector<8x128xf32>
    %13 = vector.extract_strided_slice %11 {offsets = [0, 128], sizes = [8, 128], strides = [1, 1]} : vector<8x256xf32> to vector<8x128xf32>
    %c0_13 = arith.constant 0 : index
    %c0_14 = arith.constant 0 : index
    %c0_15 = arith.constant 0 : index
    %14 = vector.load %arg4[%c0_13, %c0_14, %c0_15] : memref<4x128x128xf32, #tpu.memory_space<vmem>>, vector<1x128x128xf32>
    %15 = vector.shape_cast %14 : vector<1x128x128xf32> to vector<128x128xf32>
    %cst_16 = arith.constant dense<0.000000e+00> : vector<8x128xf32>
    %16 = tpu.matmul %12, %15, %cst_16 {dimension_numbers = #tpu.dot_dimension_numbers<[1], [0], [0], [1], [0, 0, 1, 1], [], []>} : vector<8x128xf32>, vector<128x128xf32>, vector<8x128xf32> -> vector<8x128xf32>
    %c0_17 = arith.constant 0 : index
    %c0_18 = arith.constant 0 : index
    %c0_19 = arith.constant 0 : index
    %17 = vector.load %arg5[%c0_17, %c0_18, %c0_19] : memref<4x1x128xf32, #tpu.memory_space<vmem>>, vector<1x1x128xf32>
    %18 = vector.shape_cast %17 : vector<1x1x128xf32> to vector<1x128xf32>
    %19 = vector.broadcast %18 : vector<1x128xf32> to vector<8x128xf32>
    %20 = arith.addf %16, %19 : vector<8x128xf32>
    %c0_20 = arith.constant 0 : index
    %c0_21 = arith.constant 0 : index
    %c0_22 = arith.constant 0 : index
    %21 = vector.load %arg6[%c0_20, %c0_21, %c0_22] : memref<4x128x128xf32, #tpu.memory_space<vmem>>, vector<1x128x128xf32>
    %22 = vector.shape_cast %21 : vector<1x128x128xf32> to vector<128x128xf32>
    %cst_23 = arith.constant dense<0.000000e+00> : vector<8x128xf32>
    %23 = tpu.matmul %13, %22, %cst_23 {dimension_numbers = #tpu.dot_dimension_numbers<[1], [0], [0], [1], [0, 0, 1, 1], [], []>} : vector<8x128xf32>, vector<128x128xf32>, vector<8x128xf32> -> vector<8x128xf32>
    %c0_24 = arith.constant 0 : index
    %c0_25 = arith.constant 0 : index
    %c0_26 = arith.constant 0 : index
    %24 = vector.load %arg7[%c0_24, %c0_25, %c0_26] : memref<4x1x128xf32, #tpu.memory_space<vmem>>, vector<1x1x128xf32>
    %25 = vector.shape_cast %24 : vector<1x1x128xf32> to vector<1x128xf32>
    %26 = vector.broadcast %25 : vector<1x128xf32> to vector<8x128xf32>
    %27 = arith.addf %23, %26 : vector<8x128xf32>
    %cst_27 = arith.constant 0.000000e+00 : f32
    %28 = vector.broadcast %cst_27 : f32 to vector<8x128xf32>
    %29 = arith.maximumf %20, %28 : vector<8x128xf32>
    %cst_28 = arith.constant 0.000000e+00 : f32
    %30 = vector.broadcast %cst_28 : f32 to vector<8x128xf32>
    %31 = arith.maximumf %27, %30 : vector<8x128xf32>
    %c1 = arith.constant 1 : index
    %c0_29 = arith.constant 0 : index
    %c0_30 = arith.constant 0 : index
    %32 = vector.load %arg4[%c1, %c0_29, %c0_30] : memref<4x128x128xf32, #tpu.memory_space<vmem>>, vector<1x128x128xf32>
    %33 = vector.shape_cast %32 : vector<1x128x128xf32> to vector<128x128xf32>
    %cst_31 = arith.constant dense<0.000000e+00> : vector<8x128xf32>
    %34 = tpu.matmul %29, %33, %cst_31 {dimension_numbers = #tpu.dot_dimension_numbers<[1], [0], [0], [1], [0, 0, 1, 1], [], []>} : vector<8x128xf32>, vector<128x128xf32>, vector<8x128xf32> -> vector<8x128xf32>
    %c1_32 = arith.constant 1 : index
    %c0_33 = arith.constant 0 : index
    %c0_34 = arith.constant 0 : index
    %35 = vector.load %arg5[%c1_32, %c0_33, %c0_34] : memref<4x1x128xf32, #tpu.memory_space<vmem>>, vector<1x1x128xf32>
    %36 = vector.shape_cast %35 : vector<1x1x128xf32> to vector<1x128xf32>
    %37 = vector.broadcast %36 : vector<1x128xf32> to vector<8x128xf32>
    %38 = arith.addf %34, %37 : vector<8x128xf32>
    %c1_35 = arith.constant 1 : index
    %c0_36 = arith.constant 0 : index
    %c0_37 = arith.constant 0 : index
    %39 = vector.load %arg6[%c1_35, %c0_36, %c0_37] : memref<4x128x128xf32, #tpu.memory_space<vmem>>, vector<1x128x128xf32>
    %40 = vector.shape_cast %39 : vector<1x128x128xf32> to vector<128x128xf32>
    %cst_38 = arith.constant dense<0.000000e+00> : vector<8x128xf32>
    %41 = tpu.matmul %31, %40, %cst_38 {dimension_numbers = #tpu.dot_dimension_numbers<[1], [0], [0], [1], [0, 0, 1, 1], [], []>} : vector<8x128xf32>, vector<128x128xf32>, vector<8x128xf32> -> vector<8x128xf32>
    %c1_39 = arith.constant 1 : index
    %c0_40 = arith.constant 0 : index
    %c0_41 = arith.constant 0 : index
    %42 = vector.load %arg7[%c1_39, %c0_40, %c0_41] : memref<4x1x128xf32, #tpu.memory_space<vmem>>, vector<1x1x128xf32>
    %43 = vector.shape_cast %42 : vector<1x1x128xf32> to vector<1x128xf32>
    %44 = vector.broadcast %43 : vector<1x128xf32> to vector<8x128xf32>
    %45 = arith.addf %41, %44 : vector<8x128xf32>
    %cst_42 = arith.constant 0.000000e+00 : f32
    %46 = vector.broadcast %cst_42 : f32 to vector<8x128xf32>
    %47 = arith.maximumf %38, %46 : vector<8x128xf32>
    %cst_43 = arith.constant 0.000000e+00 : f32
    %48 = vector.broadcast %cst_43 : f32 to vector<8x128xf32>
    %49 = arith.maximumf %45, %48 : vector<8x128xf32>
    %c2 = arith.constant 2 : index
    %c0_44 = arith.constant 0 : index
    %c0_45 = arith.constant 0 : index
    %50 = vector.load %arg4[%c2, %c0_44, %c0_45] : memref<4x128x128xf32, #tpu.memory_space<vmem>>, vector<1x128x128xf32>
    %51 = vector.shape_cast %50 : vector<1x128x128xf32> to vector<128x128xf32>
    %cst_46 = arith.constant dense<0.000000e+00> : vector<8x128xf32>
    %52 = tpu.matmul %47, %51, %cst_46 {dimension_numbers = #tpu.dot_dimension_numbers<[1], [0], [0], [1], [0, 0, 1, 1], [], []>} : vector<8x128xf32>, vector<128x128xf32>, vector<8x128xf32> -> vector<8x128xf32>
    %c2_47 = arith.constant 2 : index
    %c0_48 = arith.constant 0 : index
    %c0_49 = arith.constant 0 : index
    %53 = vector.load %arg5[%c2_47, %c0_48, %c0_49] : memref<4x1x128xf32, #tpu.memory_space<vmem>>, vector<1x1x128xf32>
    %54 = vector.shape_cast %53 : vector<1x1x128xf32> to vector<1x128xf32>
    %55 = vector.broadcast %54 : vector<1x128xf32> to vector<8x128xf32>
    %56 = arith.addf %52, %55 : vector<8x128xf32>
    %c2_50 = arith.constant 2 : index
    %c0_51 = arith.constant 0 : index
    %c0_52 = arith.constant 0 : index
    %57 = vector.load %arg6[%c2_50, %c0_51, %c0_52] : memref<4x128x128xf32, #tpu.memory_space<vmem>>, vector<1x128x128xf32>
    %58 = vector.shape_cast %57 : vector<1x128x128xf32> to vector<128x128xf32>
    %cst_53 = arith.constant dense<0.000000e+00> : vector<8x128xf32>
    %59 = tpu.matmul %49, %58, %cst_53 {dimension_numbers = #tpu.dot_dimension_numbers<[1], [0], [0], [1], [0, 0, 1, 1], [], []>} : vector<8x128xf32>, vector<128x128xf32>, vector<8x128xf32> -> vector<8x128xf32>
    %c2_54 = arith.constant 2 : index
    %c0_55 = arith.constant 0 : index
    %c0_56 = arith.constant 0 : index
    %60 = vector.load %arg7[%c2_54, %c0_55, %c0_56] : memref<4x1x128xf32, #tpu.memory_space<vmem>>, vector<1x1x128xf32>
    %61 = vector.shape_cast %60 : vector<1x1x128xf32> to vector<1x128xf32>
    %62 = vector.broadcast %61 : vector<1x128xf32> to vector<8x128xf32>
    %63 = arith.addf %59, %62 : vector<8x128xf32>
    %cst_57 = arith.constant 0.000000e+00 : f32
    %64 = vector.broadcast %cst_57 : f32 to vector<8x128xf32>
    %65 = arith.maximumf %56, %64 : vector<8x128xf32>
    %cst_58 = arith.constant 0.000000e+00 : f32
    %66 = vector.broadcast %cst_58 : f32 to vector<8x128xf32>
    %67 = arith.maximumf %63, %66 : vector<8x128xf32>
    %c3 = arith.constant 3 : index
    %c0_59 = arith.constant 0 : index
    %c0_60 = arith.constant 0 : index
    %68 = vector.load %arg4[%c3, %c0_59, %c0_60] : memref<4x128x128xf32, #tpu.memory_space<vmem>>, vector<1x128x128xf32>
    %69 = vector.shape_cast %68 : vector<1x128x128xf32> to vector<128x128xf32>
    %cst_61 = arith.constant dense<0.000000e+00> : vector<8x128xf32>
    %70 = tpu.matmul %65, %69, %cst_61 {dimension_numbers = #tpu.dot_dimension_numbers<[1], [0], [0], [1], [0, 0, 1, 1], [], []>} : vector<8x128xf32>, vector<128x128xf32>, vector<8x128xf32> -> vector<8x128xf32>
    %c3_62 = arith.constant 3 : index
    %c0_63 = arith.constant 0 : index
    %c0_64 = arith.constant 0 : index
    %71 = vector.load %arg5[%c3_62, %c0_63, %c0_64] : memref<4x1x128xf32, #tpu.memory_space<vmem>>, vector<1x1x128xf32>
    %72 = vector.shape_cast %71 : vector<1x1x128xf32> to vector<1x128xf32>
    %73 = vector.broadcast %72 : vector<1x128xf32> to vector<8x128xf32>
    %74 = arith.addf %70, %73 : vector<8x128xf32>
    %c3_65 = arith.constant 3 : index
    %c0_66 = arith.constant 0 : index
    %c0_67 = arith.constant 0 : index
    %75 = vector.load %arg6[%c3_65, %c0_66, %c0_67] : memref<4x128x128xf32, #tpu.memory_space<vmem>>, vector<1x128x128xf32>
    %76 = vector.shape_cast %75 : vector<1x128x128xf32> to vector<128x128xf32>
    %cst_68 = arith.constant dense<0.000000e+00> : vector<8x128xf32>
    %77 = tpu.matmul %67, %76, %cst_68 {dimension_numbers = #tpu.dot_dimension_numbers<[1], [0], [0], [1], [0, 0, 1, 1], [], []>} : vector<8x128xf32>, vector<128x128xf32>, vector<8x128xf32> -> vector<8x128xf32>
    %c3_69 = arith.constant 3 : index
    %c0_70 = arith.constant 0 : index
    %c0_71 = arith.constant 0 : index
    %78 = vector.load %arg7[%c3_69, %c0_70, %c0_71] : memref<4x1x128xf32, #tpu.memory_space<vmem>>, vector<1x1x128xf32>
    %79 = vector.shape_cast %78 : vector<1x1x128xf32> to vector<1x128xf32>
    %80 = vector.broadcast %79 : vector<1x128xf32> to vector<8x128xf32>
    %81 = arith.addf %77, %80 : vector<8x128xf32>
    %cst_72 = arith.constant 0.000000e+00 : f32
    %82 = vector.broadcast %cst_72 : f32 to vector<8x128xf32>
    %83 = arith.maximumf %74, %82 : vector<8x128xf32>
    %cst_73 = arith.constant 0.000000e+00 : f32
    %84 = vector.broadcast %cst_73 : f32 to vector<8x128xf32>
    %85 = arith.maximumf %81, %84 : vector<8x128xf32>
    %86 = tpu.concatenate %83, %85 in 1 : vector<8x128xf32>, vector<8x128xf32> -> vector<8x256xf32>
    %c0_74 = arith.constant 0 : index
    %c0_75 = arith.constant 0 : index
    %87 = vector.load %arg8[%c0_74, %c0_75] : memref<256x128xf32, #tpu.memory_space<vmem>>, vector<256x128xf32>
    %cst_76 = arith.constant dense<0.000000e+00> : vector<8x128xf32>
    %88 = tpu.matmul %86, %87, %cst_76 {dimension_numbers = #tpu.dot_dimension_numbers<[1], [0], [0], [1], [0, 0, 1, 1], [], []>} : vector<8x256xf32>, vector<256x128xf32>, vector<8x128xf32> -> vector<8x128xf32>
    %c0_77 = arith.constant 0 : index
    %c0_78 = arith.constant 0 : index
    %89 = vector.load %arg9[%c0_77, %c0_78] : memref<1x128xf32, #tpu.memory_space<vmem>>, vector<1x128xf32>
    %90 = vector.broadcast %89 : vector<1x128xf32> to vector<8x128xf32>
    %91 = arith.addf %88, %90 : vector<8x128xf32>
    %92 = tpu.iota {dimensions = array<i32: 1>} : vector<8x128xi32>
    %c23_i32 = arith.constant 23 : i32
    %93 = vector.broadcast %c23_i32 : i32 to vector<8x128xi32>
    %94 = arith.cmpi eq, %92, %93 : vector<8x128xi32>
    %95 = math.tanh %91 : vector<8x128xf32>
    %96 = arith.select %94, %95, %91 : vector<8x128xi1>, vector<8x128xf32>
    %c0_79 = arith.constant 0 : index
    %c0_80 = arith.constant 0 : index
    %97 = vector.load %arg10[%c0_79, %c0_80] : memref<8x128xf32, #tpu.memory_space<vmem>>, vector<8x128xf32>
    tpu.vector_store %arg10[%c0_79, %c0_80], %96 {strides = array<i32>} : memref<8x128xf32, #tpu.memory_space<vmem>>, vector<8x128xf32>,
    return
  }
  func.func @transform_0(%arg0: i32) -> (i32, i32) {
    %c0_i32 = arith.constant 0 : i32
    %c0_i32_0 = arith.constant 0 : i32
    return %arg0, %c0_i32 : i32, i32
  }
  func.func @transform_1(%arg0: i32) -> (i32, i32) {
    %c0_i32 = arith.constant 0 : i32
    %c0_i32_0 = arith.constant 0 : i32
    %c0_i32_1 = arith.constant 0 : i32
    return %c0_i32, %c0_i32_0 : i32, i32
  }
  func.func @transform_2(%arg0: i32) -> (i32, i32) {
    %c0_i32 = arith.constant 0 : i32
    %c0_i32_0 = arith.constant 0 : i32
    %c0_i32_1 = arith.constant 0 : i32
    return %c0_i32, %c0_i32_0 : i32, i32
  }
  func.func @transform_3(%arg0: i32) -> (i32, i32, i32) {
    %c0_i32 = arith.constant 0 : i32
    %c0_i32_0 = arith.constant 0 : i32
    %c0_i32_1 = arith.constant 0 : i32
    %c0_i32_2 = arith.constant 0 : i32
    return %c0_i32, %c0_i32_0, %c0_i32_1 : i32, i32, i32
  }
  func.func @transform_4(%arg0: i32) -> (i32, i32, i32) {
    %c0_i32 = arith.constant 0 : i32
    %c0_i32_0 = arith.constant 0 : i32
    %c0_i32_1 = arith.constant 0 : i32
    %c0_i32_2 = arith.constant 0 : i32
    return %c0_i32, %c0_i32_0, %c0_i32_1 : i32, i32, i32
  }
  func.func @transform_5(%arg0: i32) -> (i32, i32, i32) {
    %c0_i32 = arith.constant 0 : i32
    %c0_i32_0 = arith.constant 0 : i32
    %c0_i32_1 = arith.constant 0 : i32
    %c0_i32_2 = arith.constant 0 : i32
    return %c0_i32, %c0_i32_0, %c0_i32_1 : i32, i32, i32
  }
  func.func @transform_6(%arg0: i32) -> (i32, i32, i32) {
    %c0_i32 = arith.constant 0 : i32
    %c0_i32_0 = arith.constant 0 : i32
    %c0_i32_1 = arith.constant 0 : i32
    %c0_i32_2 = arith.constant 0 : i32
    return %c0_i32, %c0_i32_0, %c0_i32_1 : i32, i32, i32
  }
  func.func @transform_7(%arg0: i32) -> (i32, i32) {
    %c0_i32 = arith.constant 0 : i32
    %c0_i32_0 = arith.constant 0 : i32
    %c0_i32_1 = arith.constant 0 : i32
    return %c0_i32, %c0_i32_0 : i32, i32
  }
  func.func @transform_8(%arg0: i32) -> (i32, i32) {
    %c0_i32 = arith.constant 0 : i32
    %c0_i32_0 = arith.constant 0 : i32
    %c0_i32_1 = arith.constant 0 : i32
    return %c0_i32, %c0_i32_0 : i32, i32
  }
  func.func @transform_9(%arg0: i32) -> (i32, i32) {
    %c0_i32 = arith.constant 0 : i32
    %c0_i32_0 = arith.constant 0 : i32
    return %arg0, %c0_i32 : i32, i32
  }
}

</mosaic_0001>

<llo_original>
// kernel: neural_network2_forward.1
$region0: #{neural_network2_forward.1}
  #allocation0 [shape = 'u32[]', space=smem, size = 0x4, offset = 0x4, fixed_abs, tag = 'smem constant byte address 0x4 - core index']
  #allocation1 [shape = 'u32[144,128]{1,0:T(1,128)}', space=vmem, size = 0x12000, scoped, tag = 'internal scratch']
  #allocation2 [shape = 'f32[8,128]{1,0:T(8,128)}', space=vmem, size = 0x1000, scoped, tag = 'scratch operand']
  %s0 = inlined_call_operand.hbm [shape: f32[8,122], index: 0, kind: input, shape index: {}]
  %s1 = inlined_call_operand.hbm [shape: f32[128,256], index: 1, kind: input, shape index: {}]
  %s2 = inlined_call_operand.vmem [shape: f32[1,256], index: 2, kind: input, shape index: {}]
  %s3 = inlined_call_operand.hbm [shape: f32[4,128,128], index: 3, kind: input, shape index: {}]
  %s4 = inlined_call_operand.vmem [shape: f32[4,1,128], index: 4, kind: input, shape index: {}]
  %s5 = inlined_call_operand.hbm [shape: f32[4,128,128], index: 5, kind: input, shape index: {}]
  %s6 = inlined_call_operand.vmem [shape: f32[4,1,128], index: 6, kind: input, shape index: {}]
  %s7 = inlined_call_operand.hbm [shape: f32[256,128], index: 7, kind: input, shape index: {}]
  %s8 = inlined_call_operand.vmem [shape: f32[1,128], index: 8, kind: input, shape index: {}]
  %s9 = inlined_call_operand.vmem [shape: f32[8,128], index: 9, kind: output, shape index: {}]
  %s10 = sld [smem:[#allocation0]]
  $region66: #{neural_network2_forward.1} parent=0
    _
  %s12 = ssub.s32 1, %s10
  %s13 = scalar_select 0, %s12, %s10
  $region1: #{neural_network2_forward.1} parent=0
    #allocation3 [shape = 'u8[4096]{0}', space=vmem, size = 0x1000, scoped, tag = 'input window, operand 0, single buffered']
    #allocation4 [shape = 's32[1]{0}', space=sflag, size = 0x4, scoped, tag = 'scoped memory for neural_network2_forward.1']
    #allocation5 [shape = 'u8[131072]{0}', space=vmem, size = 0x20000, scoped, tag = 'input window, operand 1, single buffered']
    #allocation6 [shape = 's32[1]{0}', space=sflag, size = 0x4, scoped, tag = 'scoped memory for neural_network2_forward.1']
    #allocation7 [shape = 'u8[262144]{0}', space=vmem, size = 0x40000, scoped, tag = 'input window, operand 3, single buffered']
    #allocation8 [shape = 'u8[262144]{0}', space=vmem, size = 0x40000, scoped, tag = 'input window, operand 5, single buffered']
    #allocation9 [shape = 's32[1]{0}', space=sflag, size = 0x4, scoped, tag = 'scoped memory for neural_network2_forward.1']
    #allocation10 [shape = 'u8[131072]{0}', space=vmem, size = 0x20000, scoped, tag = 'input window, operand 7, single buffered']
    %14 = vsyncpa [#allocation4], 0
    %15 = vsyncpa [#allocation6], 0
    %16 = vsyncpa [#allocation9], 0
    // Predicated region
    $region2: #{neural_network2_forward.1} parent=1 // pred_check
      _
    $region3: #{neural_network2_forward.1} parent=1 // pred_check_branch
      %18 = sbr.rel (0) target = $region5
    $region4: #{neural_network2_forward.1} parent=1 // pred_region
      %s20 = ssub.s32 128, 128
      %21 = vsyncadd [#allocation4], %s20
      %s23 = sshll.u32 [#allocation3], 4
      %s24 = int_to_ptr.vmem [resolvable:$true] %s23
      %26 = dma.hbm_to_vmem [thread:$0]  %s0, 128, %s24, [#allocation4]
    $region5: #{neural_network2_forward.1} parent=1 // pred_fallthru
      _
    // Predicated region
    $region6: #{neural_network2_forward.1} parent=1 // pred_check
      _
    $region7: #{neural_network2_forward.1} parent=1 // pred_check_branch
      %28 = sbr.rel (0) target = $region9
    $region8: #{neural_network2_forward.1} parent=1 // pred_region
      %s30 = ssub.s32 4096, 4096
      %31 = vsyncadd [#allocation6], %s30
      %s32 = sshll.u32 [#allocation5], 4
      %s33 = int_to_ptr.vmem [resolvable:$true] %s32
      %38 = dma.hbm_to_vmem [thread:$0]  %s1, 4096, %s33, [#allocation6], 256, 256, 16
    $region9: #{neural_network2_forward.1} parent=1 // pred_fallthru
      _
    // Predicated region
    $region10: #{neural_network2_forward.1} parent=1 // pred_check
      _
    $region11: #{neural_network2_forward.1} parent=1 // pred_check_branch
      %40 = sbr.rel (0) target = $region13
    $region12: #{neural_network2_forward.1} parent=1 // pred_region
      _
    $region13: #{neural_network2_forward.1} parent=1 // pred_fallthru
      _
    // Predicated region
    $region14: #{neural_network2_forward.1} parent=1 // pred_check
      _
    $region15: #{neural_network2_forward.1} parent=1 // pred_check_branch
      %42 = sbr.rel (0) target = $region17
    $region16: #{neural_network2_forward.1} parent=1 // pred_region
      %s44 = ssub.s32 8192, 8192
      %45 = vsyncadd [#allocation6], %s44
      %s46 = sshll.u32 [#allocation7], 4
      %s47 = int_to_ptr.vmem [resolvable:$true] %s46
      %52 = dma.hbm_to_vmem [thread:$0]  %s3, 8192, %s47, [#allocation6], 128, 128, 8
    $region17: #{neural_network2_forward.1} parent=1 // pred_fallthru
      _
    // Predicated region
    $region18: #{neural_network2_forward.1} parent=1 // pred_check
      _
    $region19: #{neural_network2_forward.1} parent=1 // pred_check_branch
      %54 = sbr.rel (0) target = $region21
    $region20: #{neural_network2_forward.1} parent=1 // pred_region
      _
    $region21: #{neural_network2_forward.1} parent=1 // pred_fallthru
      _
    // Predicated region
    $region22: #{neural_network2_forward.1} parent=1 // pred_check
      _
    $region23: #{neural_network2_forward.1} parent=1 // pred_check_branch
      %56 = sbr.rel (0) target = $region25
    $region24: #{neural_network2_forward.1} parent=1 // pred_region
      %s58 = ssub.s32 8192, 8192
      %59 = vsyncadd [#allocation9], %s58
      %s60 = sshll.u32 [#allocation8], 4
      %s61 = int_to_ptr.vmem [resolvable:$true] %s60
      %66 = dma.hbm_to_vmem [thread:$0]  %s5, 8192, %s61, [#allocation9], 128, 128, 8
    $region25: #{neural_network2_forward.1} parent=1 // pred_fallthru
      _
    // Predicated region
    $region26: #{neural_network2_forward.1} parent=1 // pred_check
      _
    $region27: #{neural_network2_forward.1} parent=1 // pred_check_branch
      %68 = sbr.rel (0) target = $region29
    $region28: #{neural_network2_forward.1} parent=1 // pred_region
      _
    $region29: #{neural_network2_forward.1} parent=1 // pred_fallthru
      _
    // Predicated region
    $region30: #{neural_network2_forward.1} parent=1 // pred_check
      _
    $region31: #{neural_network2_forward.1} parent=1 // pred_check_branch
      %70 = sbr.rel (0) target = $region33
    $region32: #{neural_network2_forward.1} parent=1 // pred_region
      %s72 = ssub.s32 4096, 4096
      %73 = vsyncadd [#allocation9], %s72
      %s74 = sshll.u32 [#allocation10], 4
      %s75 = int_to_ptr.vmem [resolvable:$true] %s74
      %80 = dma.hbm_to_vmem [thread:$0]  %s7, 4096, %s75, [#allocation9], 128, 128, 8
    $region33: #{neural_network2_forward.1} parent=1 // pred_fallthru
      _
    // Predicated region
    $region34: #{neural_network2_forward.1} parent=1 // pred_check
      _
    $region35: #{neural_network2_forward.1} parent=1 // pred_check_branch
      %82 = sbr.rel (0) target = $region37
    $region36: #{neural_network2_forward.1} parent=1 // pred_region
      _
    $region37: #{neural_network2_forward.1} parent=1 // pred_fallthru
      _
    // Predicated region
    $region38: #{neural_network2_forward.1} parent=1 // pred_check
      _
    $region39: #{neural_network2_forward.1} parent=1 // pred_check_branch
      %84 = sbr.rel (0) target = $region41
    $region40: #{neural_network2_forward.1} parent=1 // pred_region
      %85 = dma.done [#allocation4], 128
    $region41: #{neural_network2_forward.1} parent=1 // pred_fallthru
      _
    // Predicated region
    $region42: #{neural_network2_forward.1} parent=1 // pred_check
      _
    $region43: #{neural_network2_forward.1} parent=1 // pred_check_branch
      %87 = sbr.rel (0) target = $region45
    $region44: #{neural_network2_forward.1} parent=1 // pred_region
      %88 = dma.done [#allocation6], 4096
    $region45: #{neural_network2_forward.1} parent=1 // pred_fallthru
      _
    // Predicated region
    $region46: #{neural_network2_forward.1} parent=1 // pred_check
      _
    $region47: #{neural_network2_forward.1} parent=1 // pred_check_branch
      %90 = sbr.rel (0) target = $region49
    $region48: #{neural_network2_forward.1} parent=1 // pred_region
      %91 = dma.done [#allocation6], 8192
    $region49: #{neural_network2_forward.1} parent=1 // pred_fallthru
      _
    // Predicated region
    $region50: #{neural_network2_forward.1} parent=1 // pred_check
      _
    $region51: #{neural_network2_forward.1} parent=1 // pred_check_branch
      %93 = sbr.rel (0) target = $region53
    $region52: #{neural_network2_forward.1} parent=1 // pred_region
      %94 = dma.done [#allocation9], 8192
    $region53: #{neural_network2_forward.1} parent=1 // pred_fallthru
      _
    // Predicated region
    $region54: #{neural_network2_forward.1} parent=1 // pred_check
      _
    $region55: #{neural_network2_forward.1} parent=1 // pred_check_branch
      %96 = sbr.rel (0) target = $region57
    $region56: #{neural_network2_forward.1} parent=1 // pred_region
      %97 = dma.done [#allocation9], 4096
    $region57: #{neural_network2_forward.1} parent=1 // pred_fallthru
      _
    %98 = vst [vmem:[#allocation2] sm:$0xff] 0.0
    %v99 = vld [vmem:[#allocation3] sm:$0xff]
    %vm100 = vcmask 998400
    %101 = vst.msk [vmem:[#allocation2] sm:$0xff] %vm100, %v99
    %v102 = vld [vmem:[#allocation2] sm:$0xff]
    %v103 = vld [vmem:[#allocation5] sm:$0xff]
    %v104 = vld [vmem:[#allocation5 + $0x8] sm:$0xff]
    %v105 = vld [vmem:[#allocation5 + $0x10] sm:$0xff]
    %v106 = vld [vmem:[#allocation5 + $0x18] sm:$0xff]
    %v107 = vld [vmem:[#allocation5 + $0x20] sm:$0xff]
    %v108 = vld [vmem:[#allocation5 + $0x28] sm:$0xff]
    %v109 = vld [vmem:[#allocation5 + $0x30] sm:$0xff]
    %v110 = vld [vmem:[#allocation5 + $0x38] sm:$0xff]
    %v111 = vld [vmem:[#allocation5 + $0x40] sm:$0xff]
    %v112 = vld [vmem:[#allocation5 + $0x48] sm:$0xff]
    %v113 = vld [vmem:[#allocation5 + $0x50] sm:$0xff]
    %v114 = vld [vmem:[#allocation5 + $0x58] sm:$0xff]
    %v115 = vld [vmem:[#allocation5 + $0x60] sm:$0xff]
    %v116 = vld [vmem:[#allocation5 + $0x68] sm:$0xff]
    %v117 = vld [vmem:[#allocation5 + $0x70] sm:$0xff]
    %v118 = vld [vmem:[#allocation5 + $0x78] sm:$0xff]
    %v119 = vld [vmem:[#allocation5 + $0x80] sm:$0xff]
    %v120 = vld [vmem:[#allocation5 + $0x88] sm:$0xff]
    %v121 = vld [vmem:[#allocation5 + $0x90] sm:$0xff]
    %v122 = vld [vmem:[#allocation5 + $0x98] sm:$0xff]
    %v123 = vld [vmem:[#allocation5 + $0xa0] sm:$0xff]
    %v124 = vld [vmem:[#allocation5 + $0xa8] sm:$0xff]
    %v125 = vld [vmem:[#allocation5 + $0xb0] sm:$0xff]
    %v126 = vld [vmem:[#allocation5 + $0xb8] sm:$0xff]
    %v127 = vld [vmem:[#allocation5 + $0xc0] sm:$0xff]
    %v128 = vld [vmem:[#allocation5 + $0xc8] sm:$0xff]
    %v129 = vld [vmem:[#allocation5 + $0xd0] sm:$0xff]
    %v130 = vld [vmem:[#allocation5 + $0xd8] sm:$0xff]
    %v131 = vld [vmem:[#allocation5 + $0xe0] sm:$0xff]
    %v132 = vld [vmem:[#allocation5 + $0xe8] sm:$0xff]
    %v133 = vld [vmem:[#allocation5 + $0xf0] sm:$0xff]
    %v134 = vld [vmem:[#allocation5 + $0xf8] sm:$0xff]
    %v135 = vld [vmem:[%s2] sm:$0x3]
    %v137 = vlaneseq
    %v138 = vshrl.u32 %v137, 7
    %v139 = vsub.s32 0, %v138
    %v140 = vrot.slane %v135, %v139
    %v141 = vlaneseq
    %v142 = vshrl.u32 %v141, 7
    %v143 = vsub.s32 1, %v142
    %v144 = vrot.slane %v135, %v143
    %147 = vmatprep.subr.mxu0 %v104
    %148 = vmatpush1.msra.mxu0 %v103
    %149 = vmatprep.subr.mxu0 %v106
    %150 = vmatpush1.msra.mxu0 %v105
    %151 = vmatprep.subr.mxu0 %v108
    %152 = vmatpush1.msra.mxu0 %v107
    %153 = vmatprep.subr.mxu0 %v110
    %154 = vmatpush1.msra.mxu0 %v109
    %155 = vmatprep.subr.mxu0 %v112
    %156 = vmatpush1.msra.mxu0 %v111
    %157 = vmatprep.subr.mxu0 %v114
    %158 = vmatpush1.msra.mxu0 %v113
    %159 = vmatprep.subr.mxu0 %v116
    %160 = vmatpush1.msra.mxu0 %v115
    %161 = vmatprep.subr.mxu0 %v118
    %162 = vmatpush1.msra.mxu0 %v117
    %163 = vmatprep.subr.mxu0 %v120
    %164 = vmatpush1.msra.mxu0 %v119
    %165 = vmatprep.subr.mxu0 %v122
    %166 = vmatpush1.msra.mxu0 %v121
    %167 = vmatprep.subr.mxu0 %v124
    %168 = vmatpush1.msra.mxu0 %v123
    %169 = vmatprep.subr.mxu0 %v126
    %170 = vmatpush1.msra.mxu0 %v125
    %171 = vmatprep.subr.mxu0 %v128
    %172 = vmatpush1.msra.mxu0 %v127
    %173 = vmatprep.subr.mxu0 %v130
    %174 = vmatpush1.msra.mxu0 %v129
    %175 = vmatprep.subr.mxu0 %v132
    %176 = vmatpush1.msra.mxu0 %v131
    %177 = vmatprep.subr.mxu0 %v134
    %178 = vmatpush1.msra.mxu0 %v133
    %179 = vmatprep.subr.mxu0 0.0
    %180 = vmatpush1.msra.mxu0 0.0
    %181 = vmatprep.subr.mxu0 0.0
    %182 = vmatpush1.msra.mxu0 0.0
    %183 = vmatprep.subr.mxu0 0.0
    %184 = vmatpush1.msra.mxu0 0.0
    %185 = vmatprep.subr.mxu0 0.0
    %186 = vmatpush1.msra.mxu0 0.0
    %187 = vmatprep.subr.mxu0 0.0
    %188 = vmatpush1.msra.mxu0 0.0
    %189 = vmatprep.subr.mxu0 0.0
    %190 = vmatpush1.msra.mxu0 0.0
    %191 = vmatprep.subr.mxu0 0.0
    %192 = vmatpush1.msra.mxu0 0.0
    %193 = vmatprep.subr.mxu0 0.0
    %194 = vmatpush1.msra.mxu0 0.0
    %195 = vmatprep.subr.mxu0 0.0
    %196 = vmatpush1.msra.mxu0 0.0
    %197 = vmatprep.subr.mxu0 0.0
    %198 = vmatpush1.msra.mxu0 0.0
    %199 = vmatprep.subr.mxu0 0.0
    %200 = vmatpush1.msra.mxu0 0.0
    %201 = vmatprep.subr.mxu0 0.0
    %202 = vmatpush1.msra.mxu0 0.0
    %203 = vmatprep.subr.mxu0 0.0
    %204 = vmatpush1.msra.mxu0 0.0
    %205 = vmatprep.subr.mxu0 0.0
    %206 = vmatpush1.msra.mxu0 0.0
    %207 = vmatprep.subr.mxu0 0.0
    %208 = vmatpush1.msra.mxu0 0.0
    %209 = vmatprep.subr.mxu0 0.0
    %210 = vmatpush1.msra.mxu0 0.0
    %211 = vmatprep.mubr.f32.mxu0 0.0
    %212 = vmatmul.mubr.f32.gmra.mrb[0].mxu0 %v102
    %v213 = vpop.f32.mrb[0].mxu0
    %v214 = vadd.f32 %v140, %v213
    %v215 = vpop.f32.mrb[0].mxu0
    %v216 = vadd.f32 %v144, %v215
    %217 = vdwg.mxu0
    %v218 = vmax.f32 %v214, 0.0
    %v219 = vmax.f32 %v216, 0.0
    %v220 = vld [vmem:[#allocation7] sm:$0xff]
    %v221 = vld [vmem:[#allocation7 + $0x8] sm:$0xff]
    %v222 = vld [vmem:[#allocation7 + $0x10] sm:$0xff]
    %v223 = vld [vmem:[#allocation7 + $0x18] sm:$0xff]
    %v224 = vld [vmem:[#allocation7 + $0x20] sm:$0xff]
    %v225 = vld [vmem:[#allocation7 + $0x28] sm:$0xff]
    %v226 = vld [vmem:[#allocation7 + $0x30] sm:$0xff]
    %v227 = vld [vmem:[#allocation7 + $0x38] sm:$0xff]
    %v228 = vld [vmem:[#allocation7 + $0x40] sm:$0xff]
    %v229 = vld [vmem:[#allocation7 + $0x48] sm:$0xff]
    %v230 = vld [vmem:[#allocation7 + $0x50] sm:$0xff]
    %v231 = vld [vmem:[#allocation7 + $0x58] sm:$0xff]
    %v232 = vld [vmem:[#allocation7 + $0x60] sm:$0xff]
    %v233 = vld [vmem:[#allocation7 + $0x68] sm:$0xff]
    %v234 = vld [vmem:[#allocation7 + $0x70] sm:$0xff]
    %v235 = vld [vmem:[#allocation7 + $0x78] sm:$0xff]
    %v236 = vld [vmem:[%s4] sm:$0x1]
    %v238 = vlaneseq
    %v239 = vshrl.u32 %v238, 7
    %v240 = vsub.s32 0, %v239
    %v241 = vrot.slane %v236, %v240
    %243 = vmatprep.subr.mxu0 0.0
    %244 = vmatpush1.msra.mxu0 %v220
    %245 = vmatprep.subr.mxu0 0.0
    %246 = vmatpush1.msra.mxu0 %v221
    %247 = vmatprep.subr.mxu0 0.0
    %248 = vmatpush1.msra.mxu0 %v222
    %249 = vmatprep.subr.mxu0 0.0
    %250 = vmatpush1.msra.mxu0 %v223
    %251 = vmatprep.subr.mxu0 0.0
    %252 = vmatpush1.msra.mxu0 %v224
    %253 = vmatprep.subr.mxu0 0.0
    %254 = vmatpush1.msra.mxu0 %v225
    %255 = vmatprep.subr.mxu0 0.0
    %256 = vmatpush1.msra.mxu0 %v226
    %257 = vmatprep.subr.mxu0 0.0
    %258 = vmatpush1.msra.mxu0 %v227
    %259 = vmatprep.subr.mxu0 0.0
    %260 = vmatpush1.msra.mxu0 %v228
    %261 = vmatprep.subr.mxu0 0.0
    %262 = vmatpush1.msra.mxu0 %v229
    %263 = vmatprep.subr.mxu0 0.0
    %264 = vmatpush1.msra.mxu0 %v230
    %265 = vmatprep.subr.mxu0 0.0
    %266 = vmatpush1.msra.mxu0 %v231
    %267 = vmatprep.subr.mxu0 0.0
    %268 = vmatpush1.msra.mxu0 %v232
    %269 = vmatprep.subr.mxu0 0.0
    %270 = vmatpush1.msra.mxu0 %v233
    %271 = vmatprep.subr.mxu0 0.0
    %272 = vmatpush1.msra.mxu0 %v234
    %273 = vmatprep.subr.mxu0 0.0
    %274 = vmatpush1.msra.mxu0 %v235
    %275 = vmatprep.subr.mxu0 0.0
    %276 = vmatpush1.msra.mxu0 0.0
    %277 = vmatprep.subr.mxu0 0.0
    %278 = vmatpush1.msra.mxu0 0.0
    %279 = vmatprep.subr.mxu0 0.0
    %280 = vmatpush1.msra.mxu0 0.0
    %281 = vmatprep.subr.mxu0 0.0
    %282 = vmatpush1.msra.mxu0 0.0
    %283 = vmatprep.subr.mxu0 0.0
    %284 = vmatpush1.msra.mxu0 0.0
    %285 = vmatprep.subr.mxu0 0.0
    %286 = vmatpush1.msra.mxu0 0.0
    %287 = vmatprep.subr.mxu0 0.0
    %288 = vmatpush1.msra.mxu0 0.0
    %289 = vmatprep.subr.mxu0 0.0
    %290 = vmatpush1.msra.mxu0 0.0
    %291 = vmatprep.subr.mxu0 0.0
    %292 = vmatpush1.msra.mxu0 0.0
    %293 = vmatprep.subr.mxu0 0.0
    %294 = vmatpush1.msra.mxu0 0.0
    %295 = vmatprep.subr.mxu0 0.0
    %296 = vmatpush1.msra.mxu0 0.0
    %297 = vmatprep.subr.mxu0 0.0
    %298 = vmatpush1.msra.mxu0 0.0
    %299 = vmatprep.subr.mxu0 0.0
    %300 = vmatpush1.msra.mxu0 0.0
    %301 = vmatprep.subr.mxu0 0.0
    %302 = vmatpush1.msra.mxu0 0.0
    %303 = vmatprep.subr.mxu0 0.0
    %304 = vmatpush1.msra.mxu0 0.0
    %305 = vmatprep.subr.mxu0 0.0
    %306 = vmatpush1.msra.mxu0 0.0
    %307 = vmatprep.mubr.f32.mxu0 0.0
    %308 = vmatmul.mubr.f32.gmra.mrb[0].mxu0 %v218
    %v309 = vpop.f32.mrb[0].mxu0
    %v310 = vadd.f32 %v241, %v309
    %v311 = vpop.f32.mrb[0].mxu0
    %312 = vdwg.mxu0
    %v313 = vld [vmem:[#allocation8] sm:$0xff]
    %v314 = vld [vmem:[#allocation8 + $0x8] sm:$0xff]
    %v315 = vld [vmem:[#allocation8 + $0x10] sm:$0xff]
    %v316 = vld [vmem:[#allocation8 + $0x18] sm:$0xff]
    %v317 = vld [vmem:[#allocation8 + $0x20] sm:$0xff]
    %v318 = vld [vmem:[#allocation8 + $0x28] sm:$0xff]
    %v319 = vld [vmem:[#allocation8 + $0x30] sm:$0xff]
    %v320 = vld [vmem:[#allocation8 + $0x38] sm:$0xff]
    %v321 = vld [vmem:[#allocation8 + $0x40] sm:$0xff]
    %v322 = vld [vmem:[#allocation8 + $0x48] sm:$0xff]
    %v323 = vld [vmem:[#allocation8 + $0x50] sm:$0xff]
    %v324 = vld [vmem:[#allocation8 + $0x58] sm:$0xff]
    %v325 = vld [vmem:[#allocation8 + $0x60] sm:$0xff]
    %v326 = vld [vmem:[#allocation8 + $0x68] sm:$0xff]
    %v327 = vld [vmem:[#allocation8 + $0x70] sm:$0xff]
    %v328 = vld [vmem:[#allocation8 + $0x78] sm:$0xff]
    %v329 = vld [vmem:[%s6] sm:$0x1]
    %v331 = vlaneseq
    %v332 = vshrl.u32 %v331, 7
    %v333 = vsub.s32 0, %v332
    %v334 = vrot.slane %v329, %v333
    %336 = vmatprep.subr.mxu0 0.0
    %337 = vmatpush1.msra.mxu0 %v313
    %338 = vmatprep.subr.mxu0 0.0
    %339 = vmatpush1.msra.mxu0 %v314
    %340 = vmatprep.subr.mxu0 0.0
    %341 = vmatpush1.msra.mxu0 %v315
    %342 = vmatprep.subr.mxu0 0.0
    %343 = vmatpush1.msra.mxu0 %v316
    %344 = vmatprep.subr.mxu0 0.0
    %345 = vmatpush1.msra.mxu0 %v317
    %346 = vmatprep.subr.mxu0 0.0
    %347 = vmatpush1.msra.mxu0 %v318
    %348 = vmatprep.subr.mxu0 0.0
    %349 = vmatpush1.msra.mxu0 %v319
    %350 = vmatprep.subr.mxu0 0.0
    %351 = vmatpush1.msra.mxu0 %v320
    %352 = vmatprep.subr.mxu0 0.0
    %353 = vmatpush1.msra.mxu0 %v321
    %354 = vmatprep.subr.mxu0 0.0
    %355 = vmatpush1.msra.mxu0 %v322
    %356 = vmatprep.subr.mxu0 0.0
    %357 = vmatpush1.msra.mxu0 %v323
    %358 = vmatprep.subr.mxu0 0.0
    %359 = vmatpush1.msra.mxu0 %v324
    %360 = vmatprep.subr.mxu0 0.0
    %361 = vmatpush1.msra.mxu0 %v325
    %362 = vmatprep.subr.mxu0 0.0
    %363 = vmatpush1.msra.mxu0 %v326
    %364 = vmatprep.subr.mxu0 0.0
    %365 = vmatpush1.msra.mxu0 %v327
    %366 = vmatprep.subr.mxu0 0.0
    %367 = vmatpush1.msra.mxu0 %v328
    %368 = vmatprep.subr.mxu0 0.0
    %369 = vmatpush1.msra.mxu0 0.0
    %370 = vmatprep.subr.mxu0 0.0
    %371 = vmatpush1.msra.mxu0 0.0
    %372 = vmatprep.subr.mxu0 0.0
    %373 = vmatpush1.msra.mxu0 0.0
    %374 = vmatprep.subr.mxu0 0.0
    %375 = vmatpush1.msra.mxu0 0.0
    %376 = vmatprep.subr.mxu0 0.0
    %377 = vmatpush1.msra.mxu0 0.0
    %378 = vmatprep.subr.mxu0 0.0
    %379 = vmatpush1.msra.mxu0 0.0
    %380 = vmatprep.subr.mxu0 0.0
    %381 = vmatpush1.msra.mxu0 0.0
    %382 = vmatprep.subr.mxu0 0.0
    %383 = vmatpush1.msra.mxu0 0.0
    %384 = vmatprep.subr.mxu0 0.0
    %385 = vmatpush1.msra.mxu0 0.0
    %386 = vmatprep.subr.mxu0 0.0
    %387 = vmatpush1.msra.mxu0 0.0
    %388 = vmatprep.subr.mxu0 0.0
    %389 = vmatpush1.msra.mxu0 0.0
    %390 = vmatprep.subr.mxu0 0.0
    %391 = vmatpush1.msra.mxu0 0.0
    %392 = vmatprep.subr.mxu0 0.0
    %393 = vmatpush1.msra.mxu0 0.0
    %394 = vmatprep.subr.mxu0 0.0
    %395 = vmatpush1.msra.mxu0 0.0
    %396 = vmatprep.subr.mxu0 0.0
    %397 = vmatpush1.msra.mxu0 0.0
    %398 = vmatprep.subr.mxu0 0.0
    %399 = vmatpush1.msra.mxu0 0.0
    %400 = vmatprep.mubr.f32.mxu0 0.0
    %401 = vmatmul.mubr.f32.gmra.mrb[0].mxu0 %v219
    %v402 = vpop.f32.mrb[0].mxu0
    %v403 = vadd.f32 %v334, %v402
    %v404 = vpop.f32.mrb[0].mxu0
    %405 = vdwg.mxu0
    %v406 = vmax.f32 %v310, 0.0
    %v407 = vmax.f32 %v403, 0.0
    %s408 = scalar_lea.vmem [#allocation7], 128
    %v409 = vld [vmem:[%s408] sm:$0xff]
    %v410 = vld [vmem:[%s408 + $0x8] sm:$0xff]
    %v411 = vld [vmem:[%s408 + $0x10] sm:$0xff]
    %v412 = vld [vmem:[%s408 + $0x18] sm:$0xff]
    %v413 = vld [vmem:[%s408 + $0x20] sm:$0xff]
    %v414 = vld [vmem:[%s408 + $0x28] sm:$0xff]
    %v415 = vld [vmem:[%s408 + $0x30] sm:$0xff]
    %v416 = vld [vmem:[%s408 + $0x38] sm:$0xff]
    %v417 = vld [vmem:[%s408 + $0x40] sm:$0xff]
    %v418 = vld [vmem:[%s408 + $0x48] sm:$0xff]
    %v419 = vld [vmem:[%s408 + $0x50] sm:$0xff]
    %v420 = vld [vmem:[%s408 + $0x58] sm:$0xff]
    %v421 = vld [vmem:[%s408 + $0x60] sm:$0xff]
    %v422 = vld [vmem:[%s408 + $0x68] sm:$0xff]
    %v423 = vld [vmem:[%s408 + $0x70] sm:$0xff]
    %v424 = vld [vmem:[%s408 + $0x78] sm:$0xff]
    %s425 = scalar_lea.vmem %s4, 1
    %v426 = vld [vmem:[%s425] sm:$0x1]
    %v428 = vlaneseq
    %v429 = vshrl.u32 %v428, 7
    %v430 = vsub.s32 0, %v429
    %v431 = vrot.slane %v426, %v430
    %433 = vmatprep.subr.mxu0 0.0
    %434 = vmatpush1.msra.mxu0 %v409
    %435 = vmatprep.subr.mxu0 0.0
    %436 = vmatpush1.msra.mxu0 %v410
    %437 = vmatprep.subr.mxu0 0.0
    %438 = vmatpush1.msra.mxu0 %v411
    %439 = vmatprep.subr.mxu0 0.0
    %440 = vmatpush1.msra.mxu0 %v412
    %441 = vmatprep.subr.mxu0 0.0
    %442 = vmatpush1.msra.mxu0 %v413
    %443 = vmatprep.subr.mxu0 0.0
    %444 = vmatpush1.msra.mxu0 %v414
    %445 = vmatprep.subr.mxu0 0.0
    %446 = vmatpush1.msra.mxu0 %v415
    %447 = vmatprep.subr.mxu0 0.0
    %448 = vmatpush1.msra.mxu0 %v416
    %449 = vmatprep.subr.mxu0 0.0
    %450 = vmatpush1.msra.mxu0 %v417
    %451 = vmatprep.subr.mxu0 0.0
    %452 = vmatpush1.msra.mxu0 %v418
    %453 = vmatprep.subr.mxu0 0.0
    %454 = vmatpush1.msra.mxu0 %v419
    %455 = vmatprep.subr.mxu0 0.0
    %456 = vmatpush1.msra.mxu0 %v420
    %457 = vmatprep.subr.mxu0 0.0
    %458 = vmatpush1.msra.mxu0 %v421
    %459 = vmatprep.subr.mxu0 0.0
    %460 = vmatpush1.msra.mxu0 %v422
    %461 = vmatprep.subr.mxu0 0.0
    %462 = vmatpush1.msra.mxu0 %v423
    %463 = vmatprep.subr.mxu0 0.0
    %464 = vmatpush1.msra.mxu0 %v424
    %465 = vmatprep.subr.mxu0 0.0
    %466 = vmatpush1.msra.mxu0 0.0
    %467 = vmatprep.subr.mxu0 0.0
    %468 = vmatpush1.msra.mxu0 0.0
    %469 = vmatprep.subr.mxu0 0.0
    %470 = vmatpush1.msra.mxu0 0.0
    %471 = vmatprep.subr.mxu0 0.0
    %472 = vmatpush1.msra.mxu0 0.0
    %473 = vmatprep.subr.mxu0 0.0
    %474 = vmatpush1.msra.mxu0 0.0
    %475 = vmatprep.subr.mxu0 0.0
    %476 = vmatpush1.msra.mxu0 0.0
    %477 = vmatprep.subr.mxu0 0.0
    %478 = vmatpush1.msra.mxu0 0.0
    %479 = vmatprep.subr.mxu0 0.0
    %480 = vmatpush1.msra.mxu0 0.0
    %481 = vmatprep.subr.mxu0 0.0
    %482 = vmatpush1.msra.mxu0 0.0
    %483 = vmatprep.subr.mxu0 0.0
    %484 = vmatpush1.msra.mxu0 0.0
    %485 = vmatprep.subr.mxu0 0.0
    %486 = vmatpush1.msra.mxu0 0.0
    %487 = vmatprep.subr.mxu0 0.0
    %488 = vmatpush1.msra.mxu0 0.0
    %489 = vmatprep.subr.mxu0 0.0
    %490 = vmatpush1.msra.mxu0 0.0
    %491 = vmatprep.subr.mxu0 0.0
    %492 = vmatpush1.msra.mxu0 0.0
    %493 = vmatprep.subr.mxu0 0.0
    %494 = vmatpush1.msra.mxu0 0.0
    %495 = vmatprep.subr.mxu0 0.0
    %496 = vmatpush1.msra.mxu0 0.0
    %497 = vmatprep.mubr.f32.mxu0 0.0
    %498 = vmatmul.mubr.f32.gmra.mrb[0].mxu0 %v406
    %v499 = vpop.f32.mrb[0].mxu0
    %v500 = vadd.f32 %v431, %v499
    %v501 = vpop.f32.mrb[0].mxu0
    %502 = vdwg.mxu0
    %s503 = scalar_lea.vmem [#allocation8], 128
    %v504 = vld [vmem:[%s503] sm:$0xff]
    %v505 = vld [vmem:[%s503 + $0x8] sm:$0xff]
    %v506 = vld [vmem:[%s503 + $0x10] sm:$0xff]
    %v507 = vld [vmem:[%s503 + $0x18] sm:$0xff]
    %v508 = vld [vmem:[%s503 + $0x20] sm:$0xff]
    %v509 = vld [vmem:[%s503 + $0x28] sm:$0xff]
    %v510 = vld [vmem:[%s503 + $0x30] sm:$0xff]
    %v511 = vld [vmem:[%s503 + $0x38] sm:$0xff]
    %v512 = vld [vmem:[%s503 + $0x40] sm:$0xff]
    %v513 = vld [vmem:[%s503 + $0x48] sm:$0xff]
    %v514 = vld [vmem:[%s503 + $0x50] sm:$0xff]
    %v515 = vld [vmem:[%s503 + $0x58] sm:$0xff]
    %v516 = vld [vmem:[%s503 + $0x60] sm:$0xff]
    %v517 = vld [vmem:[%s503 + $0x68] sm:$0xff]
    %v518 = vld [vmem:[%s503 + $0x70] sm:$0xff]
    %v519 = vld [vmem:[%s503 + $0x78] sm:$0xff]
    %s520 = scalar_lea.vmem %s6, 1
    %v521 = vld [vmem:[%s520] sm:$0x1]
    %v523 = vlaneseq
    %v524 = vshrl.u32 %v523, 7
    %v525 = vsub.s32 0, %v524
    %v526 = vrot.slane %v521, %v525
    %528 = vmatprep.subr.mxu0 0.0
    %529 = vmatpush1.msra.mxu0 %v504
    %530 = vmatprep.subr.mxu0 0.0
    %531 = vmatpush1.msra.mxu0 %v505
    %532 = vmatprep.subr.mxu0 0.0
    %533 = vmatpush1.msra.mxu0 %v506
    %534 = vmatprep.subr.mxu0 0.0
    %535 = vmatpush1.msra.mxu0 %v507
    %536 = vmatprep.subr.mxu0 0.0
    %537 = vmatpush1.msra.mxu0 %v508
    %538 = vmatprep.subr.mxu0 0.0
    %539 = vmatpush1.msra.mxu0 %v509
    %540 = vmatprep.subr.mxu0 0.0
    %541 = vmatpush1.msra.mxu0 %v510
    %542 = vmatprep.subr.mxu0 0.0
    %543 = vmatpush1.msra.mxu0 %v511
    %544 = vmatprep.subr.mxu0 0.0
    %545 = vmatpush1.msra.mxu0 %v512
    %546 = vmatprep.subr.mxu0 0.0
    %547 = vmatpush1.msra.mxu0 %v513
    %548 = vmatprep.subr.mxu0 0.0
    %549 = vmatpush1.msra.mxu0 %v514
    %550 = vmatprep.subr.mxu0 0.0
    %551 = vmatpush1.msra.mxu0 %v515
    %552 = vmatprep.subr.mxu0 0.0
    %553 = vmatpush1.msra.mxu0 %v516
    %554 = vmatprep.subr.mxu0 0.0
    %555 = vmatpush1.msra.mxu0 %v517
    %556 = vmatprep.subr.mxu0 0.0
    %557 = vmatpush1.msra.mxu0 %v518
    %558 = vmatprep.subr.mxu0 0.0
    %559 = vmatpush1.msra.mxu0 %v519
    %560 = vmatprep.subr.mxu0 0.0
    %561 = vmatpush1.msra.mxu0 0.0
    %562 = vmatprep.subr.mxu0 0.0
    %563 = vmatpush1.msra.mxu0 0.0
    %564 = vmatprep.subr.mxu0 0.0
    %565 = vmatpush1.msra.mxu0 0.0
    %566 = vmatprep.subr.mxu0 0.0
    %567 = vmatpush1.msra.mxu0 0.0
    %568 = vmatprep.subr.mxu0 0.0
    %569 = vmatpush1.msra.mxu0 0.0
    %570 = vmatprep.subr.mxu0 0.0
    %571 = vmatpush1.msra.mxu0 0.0
    %572 = vmatprep.subr.mxu0 0.0
    %573 = vmatpush1.msra.mxu0 0.0
    %574 = vmatprep.subr.mxu0 0.0
    %575 = vmatpush1.msra.mxu0 0.0
    %576 = vmatprep.subr.mxu0 0.0
    %577 = vmatpush1.msra.mxu0 0.0
    %578 = vmatprep.subr.mxu0 0.0
    %579 = vmatpush1.msra.mxu0 0.0
    %580 = vmatprep.subr.mxu0 0.0
    %581 = vmatpush1.msra.mxu0 0.0
    %582 = vmatprep.subr.mxu0 0.0
    %583 = vmatpush1.msra.mxu0 0.0
    %584 = vmatprep.subr.mxu0 0.0
    %585 = vmatpush1.msra.mxu0 0.0
    %586 = vmatprep.subr.mxu0 0.0
    %587 = vmatpush1.msra.mxu0 0.0
    %588 = vmatprep.subr.mxu0 0.0
    %589 = vmatpush1.msra.mxu0 0.0
    %590 = vmatprep.subr.mxu0 0.0
    %591 = vmatpush1.msra.mxu0 0.0
    %592 = vmatprep.mubr.f32.mxu0 0.0
    %593 = vmatmul.mubr.f32.gmra.mrb[0].mxu0 %v407
    %v594 = vpop.f32.mrb[0].mxu0
    %v595 = vadd.f32 %v526, %v594
    %v596 = vpop.f32.mrb[0].mxu0
    %597 = vdwg.mxu0
    %v598 = vmax.f32 %v500, 0.0
    %v599 = vmax.f32 %v595, 0.0
    %s600 = scalar_lea.vmem [#allocation7], 256
    %v601 = vld [vmem:[%s600] sm:$0xff]
    %v602 = vld [vmem:[%s600 + $0x8] sm:$0xff]
    %v603 = vld [vmem:[%s600 + $0x10] sm:$0xff]
    %v604 = vld [vmem:[%s600 + $0x18] sm:$0xff]
    %v605 = vld [vmem:[%s600 + $0x20] sm:$0xff]
    %v606 = vld [vmem:[%s600 + $0x28] sm:$0xff]
    %v607 = vld [vmem:[%s600 + $0x30] sm:$0xff]
    %v608 = vld [vmem:[%s600 + $0x38] sm:$0xff]
    %v609 = vld [vmem:[%s600 + $0x40] sm:$0xff]
    %v610 = vld [vmem:[%s600 + $0x48] sm:$0xff]
    %v611 = vld [vmem:[%s600 + $0x50] sm:$0xff]
    %v612 = vld [vmem:[%s600 + $0x58] sm:$0xff]
    %v613 = vld [vmem:[%s600 + $0x60] sm:$0xff]
    %v614 = vld [vmem:[%s600 + $0x68] sm:$0xff]
    %v615 = vld [vmem:[%s600 + $0x70] sm:$0xff]
    %v616 = vld [vmem:[%s600 + $0x78] sm:$0xff]
    %s617 = scalar_lea.vmem %s4, 2
    %v618 = vld [vmem:[%s617] sm:$0x1]
    %v620 = vlaneseq
    %v621 = vshrl.u32 %v620, 7
    %v622 = vsub.s32 0, %v621
    %v623 = vrot.slane %v618, %v622
    %625 = vmatprep.subr.mxu0 0.0
    %626 = vmatpush1.msra.mxu0 %v601
    %627 = vmatprep.subr.mxu0 0.0
    %628 = vmatpush1.msra.mxu0 %v602
    %629 = vmatprep.subr.mxu0 0.0
    %630 = vmatpush1.msra.mxu0 %v603
    %631 = vmatprep.subr.mxu0 0.0
    %632 = vmatpush1.msra.mxu0 %v604
    %633 = vmatprep.subr.mxu0 0.0
    %634 = vmatpush1.msra.mxu0 %v605
    %635 = vmatprep.subr.mxu0 0.0
    %636 = vmatpush1.msra.mxu0 %v606
    %637 = vmatprep.subr.mxu0 0.0
    %638 = vmatpush1.msra.mxu0 %v607
    %639 = vmatprep.subr.mxu0 0.0
    %640 = vmatpush1.msra.mxu0 %v608
    %641 = vmatprep.subr.mxu0 0.0
    %642 = vmatpush1.msra.mxu0 %v609
    %643 = vmatprep.subr.mxu0 0.0
    %644 = vmatpush1.msra.mxu0 %v610
    %645 = vmatprep.subr.mxu0 0.0
    %646 = vmatpush1.msra.mxu0 %v611
    %647 = vmatprep.subr.mxu0 0.0
    %648 = vmatpush1.msra.mxu0 %v612
    %649 = vmatprep.subr.mxu0 0.0
    %650 = vmatpush1.msra.mxu0 %v613
    %651 = vmatprep.subr.mxu0 0.0
    %652 = vmatpush1.msra.mxu0 %v614
    %653 = vmatprep.subr.mxu0 0.0
    %654 = vmatpush1.msra.mxu0 %v615
    %655 = vmatprep.subr.mxu0 0.0
    %656 = vmatpush1.msra.mxu0 %v616
    %657 = vmatprep.subr.mxu0 0.0
    %658 = vmatpush1.msra.mxu0 0.0
    %659 = vmatprep.subr.mxu0 0.0
    %660 = vmatpush1.msra.mxu0 0.0
    %661 = vmatprep.subr.mxu0 0.0
    %662 = vmatpush1.msra.mxu0 0.0
    %663 = vmatprep.subr.mxu0 0.0
    %664 = vmatpush1.msra.mxu0 0.0
    %665 = vmatprep.subr.mxu0 0.0
    %666 = vmatpush1.msra.mxu0 0.0
    %667 = vmatprep.subr.mxu0 0.0
    %668 = vmatpush1.msra.mxu0 0.0
    %669 = vmatprep.subr.mxu0 0.0
    %670 = vmatpush1.msra.mxu0 0.0
    %671 = vmatprep.subr.mxu0 0.0
    %672 = vmatpush1.msra.mxu0 0.0
    %673 = vmatprep.subr.mxu0 0.0
    %674 = vmatpush1.msra.mxu0 0.0
    %675 = vmatprep.subr.mxu0 0.0
    %676 = vmatpush1.msra.mxu0 0.0
    %677 = vmatprep.subr.mxu0 0.0
    %678 = vmatpush1.msra.mxu0 0.0
    %679 = vmatprep.subr.mxu0 0.0
    %680 = vmatpush1.msra.mxu0 0.0
    %681 = vmatprep.subr.mxu0 0.0
    %682 = vmatpush1.msra.mxu0 0.0
    %683 = vmatprep.subr.mxu0 0.0
    %684 = vmatpush1.msra.mxu0 0.0
    %685 = vmatprep.subr.mxu0 0.0
    %686 = vmatpush1.msra.mxu0 0.0
    %687 = vmatprep.subr.mxu0 0.0
    %688 = vmatpush1.msra.mxu0 0.0
    %689 = vmatprep.mubr.f32.mxu0 0.0
    %690 = vmatmul.mubr.f32.gmra.mrb[0].mxu0 %v598
    %v691 = vpop.f32.mrb[0].mxu0
    %v692 = vadd.f32 %v623, %v691
    %v693 = vpop.f32.mrb[0].mxu0
    %694 = vdwg.mxu0
    %s695 = scalar_lea.vmem [#allocation8], 256
    %v696 = vld [vmem:[%s695] sm:$0xff]
    %v697 = vld [vmem:[%s695 + $0x8] sm:$0xff]
    %v698 = vld [vmem:[%s695 + $0x10] sm:$0xff]
    %v699 = vld [vmem:[%s695 + $0x18] sm:$0xff]
    %v700 = vld [vmem:[%s695 + $0x20] sm:$0xff]
    %v701 = vld [vmem:[%s695 + $0x28] sm:$0xff]
    %v702 = vld [vmem:[%s695 + $0x30] sm:$0xff]
    %v703 = vld [vmem:[%s695 + $0x38] sm:$0xff]
    %v704 = vld [vmem:[%s695 + $0x40] sm:$0xff]
    %v705 = vld [vmem:[%s695 + $0x48] sm:$0xff]
    %v706 = vld [vmem:[%s695 + $0x50] sm:$0xff]
    %v707 = vld [vmem:[%s695 + $0x58] sm:$0xff]
    %v708 = vld [vmem:[%s695 + $0x60] sm:$0xff]
    %v709 = vld [vmem:[%s695 + $0x68] sm:$0xff]
    %v710 = vld [vmem:[%s695 + $0x70] sm:$0xff]
    %v711 = vld [vmem:[%s695 + $0x78] sm:$0xff]
    %s712 = scalar_lea.vmem %s6, 2
    %v713 = vld [vmem:[%s712] sm:$0x1]
    %v715 = vlaneseq
    %v716 = vshrl.u32 %v715, 7
    %v717 = vsub.s32 0, %v716
    %v718 = vrot.slane %v713, %v717
    %720 = vmatprep.subr.mxu0 0.0
    %721 = vmatpush1.msra.mxu0 %v696
    %722 = vmatprep.subr.mxu0 0.0
    %723 = vmatpush1.msra.mxu0 %v697
    %724 = vmatprep.subr.mxu0 0.0
    %725 = vmatpush1.msra.mxu0 %v698
    %726 = vmatprep.subr.mxu0 0.0
    %727 = vmatpush1.msra.mxu0 %v699
    %728 = vmatprep.subr.mxu0 0.0
    %729 = vmatpush1.msra.mxu0 %v700
    %730 = vmatprep.subr.mxu0 0.0
    %731 = vmatpush1.msra.mxu0 %v701
    %732 = vmatprep.subr.mxu0 0.0
    %733 = vmatpush1.msra.mxu0 %v702
    %734 = vmatprep.subr.mxu0 0.0
    %735 = vmatpush1.msra.mxu0 %v703
    %736 = vmatprep.subr.mxu0 0.0
    %737 = vmatpush1.msra.mxu0 %v704
    %738 = vmatprep.subr.mxu0 0.0
    %739 = vmatpush1.msra.mxu0 %v705
    %740 = vmatprep.subr.mxu0 0.0
    %741 = vmatpush1.msra.mxu0 %v706
    %742 = vmatprep.subr.mxu0 0.0
    %743 = vmatpush1.msra.mxu0 %v707
    %744 = vmatprep.subr.mxu0 0.0
    %745 = vmatpush1.msra.mxu0 %v708
    %746 = vmatprep.subr.mxu0 0.0
    %747 = vmatpush1.msra.mxu0 %v709
    %748 = vmatprep.subr.mxu0 0.0
    %749 = vmatpush1.msra.mxu0 %v710
    %750 = vmatprep.subr.mxu0 0.0
    %751 = vmatpush1.msra.mxu0 %v711
    %752 = vmatprep.subr.mxu0 0.0
    %753 = vmatpush1.msra.mxu0 0.0
    %754 = vmatprep.subr.mxu0 0.0
    %755 = vmatpush1.msra.mxu0 0.0
    %756 = vmatprep.subr.mxu0 0.0
    %757 = vmatpush1.msra.mxu0 0.0
    %758 = vmatprep.subr.mxu0 0.0
    %759 = vmatpush1.msra.mxu0 0.0
    %760 = vmatprep.subr.mxu0 0.0
    %761 = vmatpush1.msra.mxu0 0.0
    %762 = vmatprep.subr.mxu0 0.0
    %763 = vmatpush1.msra.mxu0 0.0
    %764 = vmatprep.subr.mxu0 0.0
    %765 = vmatpush1.msra.mxu0 0.0
    %766 = vmatprep.subr.mxu0 0.0
    %767 = vmatpush1.msra.mxu0 0.0
    %768 = vmatprep.subr.mxu0 0.0
    %769 = vmatpush1.msra.mxu0 0.0
    %770 = vmatprep.subr.mxu0 0.0
    %771 = vmatpush1.msra.mxu0 0.0
    %772 = vmatprep.subr.mxu0 0.0
    %773 = vmatpush1.msra.mxu0 0.0
    %774 = vmatprep.subr.mxu0 0.0
    %775 = vmatpush1.msra.mxu0 0.0
    %776 = vmatprep.subr.mxu0 0.0
    %777 = vmatpush1.msra.mxu0 0.0
    %778 = vmatprep.subr.mxu0 0.0
    %779 = vmatpush1.msra.mxu0 0.0
    %780 = vmatprep.subr.mxu0 0.0
    %781 = vmatpush1.msra.mxu0 0.0
    %782 = vmatprep.subr.mxu0 0.0
    %783 = vmatpush1.msra.mxu0 0.0
    %784 = vmatprep.mubr.f32.mxu0 0.0
    %785 = vmatmul.mubr.f32.gmra.mrb[0].mxu0 %v599
    %v786 = vpop.f32.mrb[0].mxu0
    %v787 = vadd.f32 %v718, %v786
    %v788 = vpop.f32.mrb[0].mxu0
    %789 = vdwg.mxu0
    %v790 = vmax.f32 %v692, 0.0
    %v791 = vmax.f32 %v787, 0.0
    %s792 = scalar_lea.vmem [#allocation7], 384
    %v793 = vld [vmem:[%s792] sm:$0xff]
    %v794 = vld [vmem:[%s792 + $0x8] sm:$0xff]
    %v795 = vld [vmem:[%s792 + $0x10] sm:$0xff]
    %v796 = vld [vmem:[%s792 + $0x18] sm:$0xff]
    %v797 = vld [vmem:[%s792 + $0x20] sm:$0xff]
    %v798 = vld [vmem:[%s792 + $0x28] sm:$0xff]
    %v799 = vld [vmem:[%s792 + $0x30] sm:$0xff]
    %v800 = vld [vmem:[%s792 + $0x38] sm:$0xff]
    %v801 = vld [vmem:[%s792 + $0x40] sm:$0xff]
    %v802 = vld [vmem:[%s792 + $0x48] sm:$0xff]
    %v803 = vld [vmem:[%s792 + $0x50] sm:$0xff]
    %v804 = vld [vmem:[%s792 + $0x58] sm:$0xff]
    %v805 = vld [vmem:[%s792 + $0x60] sm:$0xff]
    %v806 = vld [vmem:[%s792 + $0x68] sm:$0xff]
    %v807 = vld [vmem:[%s792 + $0x70] sm:$0xff]
    %v808 = vld [vmem:[%s792 + $0x78] sm:$0xff]
    %s809 = scalar_lea.vmem %s4, 3
    %v810 = vld [vmem:[%s809] sm:$0x1]
    %v812 = vlaneseq
    %v813 = vshrl.u32 %v812, 7
    %v814 = vsub.s32 0, %v813
    %v815 = vrot.slane %v810, %v814
    %817 = vmatprep.subr.mxu0 0.0
    %818 = vmatpush1.msra.mxu0 %v793
    %819 = vmatprep.subr.mxu0 0.0
    %820 = vmatpush1.msra.mxu0 %v794
    %821 = vmatprep.subr.mxu0 0.0
    %822 = vmatpush1.msra.mxu0 %v795
    %823 = vmatprep.subr.mxu0 0.0
    %824 = vmatpush1.msra.mxu0 %v796
    %825 = vmatprep.subr.mxu0 0.0
    %826 = vmatpush1.msra.mxu0 %v797
    %827 = vmatprep.subr.mxu0 0.0
    %828 = vmatpush1.msra.mxu0 %v798
    %829 = vmatprep.subr.mxu0 0.0
    %830 = vmatpush1.msra.mxu0 %v799
    %831 = vmatprep.subr.mxu0 0.0
    %832 = vmatpush1.msra.mxu0 %v800
    %833 = vmatprep.subr.mxu0 0.0
    %834 = vmatpush1.msra.mxu0 %v801
    %835 = vmatprep.subr.mxu0 0.0
    %836 = vmatpush1.msra.mxu0 %v802
    %837 = vmatprep.subr.mxu0 0.0
    %838 = vmatpush1.msra.mxu0 %v803
    %839 = vmatprep.subr.mxu0 0.0
    %840 = vmatpush1.msra.mxu0 %v804
    %841 = vmatprep.subr.mxu0 0.0
    %842 = vmatpush1.msra.mxu0 %v805
    %843 = vmatprep.subr.mxu0 0.0
    %844 = vmatpush1.msra.mxu0 %v806
    %845 = vmatprep.subr.mxu0 0.0
    %846 = vmatpush1.msra.mxu0 %v807
    %847 = vmatprep.subr.mxu0 0.0
    %848 = vmatpush1.msra.mxu0 %v808
    %849 = vmatprep.subr.mxu0 0.0
    %850 = vmatpush1.msra.mxu0 0.0
    %851 = vmatprep.subr.mxu0 0.0
    %852 = vmatpush1.msra.mxu0 0.0
    %853 = vmatprep.subr.mxu0 0.0
    %854 = vmatpush1.msra.mxu0 0.0
    %855 = vmatprep.subr.mxu0 0.0
    %856 = vmatpush1.msra.mxu0 0.0
    %857 = vmatprep.subr.mxu0 0.0
    %858 = vmatpush1.msra.mxu0 0.0
    %859 = vmatprep.subr.mxu0 0.0
    %860 = vmatpush1.msra.mxu0 0.0
    %861 = vmatprep.subr.mxu0 0.0
    %862 = vmatpush1.msra.mxu0 0.0
    %863 = vmatprep.subr.mxu0 0.0
    %864 = vmatpush1.msra.mxu0 0.0
    %865 = vmatprep.subr.mxu0 0.0
    %866 = vmatpush1.msra.mxu0 0.0
    %867 = vmatprep.subr.mxu0 0.0
    %868 = vmatpush1.msra.mxu0 0.0
    %869 = vmatprep.subr.mxu0 0.0
    %870 = vmatpush1.msra.mxu0 0.0
    %871 = vmatprep.subr.mxu0 0.0
    %872 = vmatpush1.msra.mxu0 0.0
    %873 = vmatprep.subr.mxu0 0.0
    %874 = vmatpush1.msra.mxu0 0.0
    %875 = vmatprep.subr.mxu0 0.0
    %876 = vmatpush1.msra.mxu0 0.0
    %877 = vmatprep.subr.mxu0 0.0
    %878 = vmatpush1.msra.mxu0 0.0
    %879 = vmatprep.subr.mxu0 0.0
    %880 = vmatpush1.msra.mxu0 0.0
    %881 = vmatprep.mubr.f32.mxu0 0.0
    %882 = vmatmul.mubr.f32.gmra.mrb[0].mxu0 %v790
    %v883 = vpop.f32.mrb[0].mxu0
    %v884 = vadd.f32 %v815, %v883
    %v885 = vpop.f32.mrb[0].mxu0
    %886 = vdwg.mxu0
    %s887 = scalar_lea.vmem [#allocation8], 384
    %v888 = vld [vmem:[%s887] sm:$0xff]
    %v889 = vld [vmem:[%s887 + $0x8] sm:$0xff]
    %v890 = vld [vmem:[%s887 + $0x10] sm:$0xff]
    %v891 = vld [vmem:[%s887 + $0x18] sm:$0xff]
    %v892 = vld [vmem:[%s887 + $0x20] sm:$0xff]
    %v893 = vld [vmem:[%s887 + $0x28] sm:$0xff]
    %v894 = vld [vmem:[%s887 + $0x30] sm:$0xff]
    %v895 = vld [vmem:[%s887 + $0x38] sm:$0xff]
    %v896 = vld [vmem:[%s887 + $0x40] sm:$0xff]
    %v897 = vld [vmem:[%s887 + $0x48] sm:$0xff]
    %v898 = vld [vmem:[%s887 + $0x50] sm:$0xff]
    %v899 = vld [vmem:[%s887 + $0x58] sm:$0xff]
    %v900 = vld [vmem:[%s887 + $0x60] sm:$0xff]
    %v901 = vld [vmem:[%s887 + $0x68] sm:$0xff]
    %v902 = vld [vmem:[%s887 + $0x70] sm:$0xff]
    %v903 = vld [vmem:[%s887 + $0x78] sm:$0xff]
    %s904 = scalar_lea.vmem %s6, 3
    %v905 = vld [vmem:[%s904] sm:$0x1]
    %v907 = vlaneseq
    %v908 = vshrl.u32 %v907, 7
    %v909 = vsub.s32 0, %v908
    %v910 = vrot.slane %v905, %v909
    %912 = vmatprep.subr.mxu0 0.0
    %913 = vmatpush1.msra.mxu0 %v888
    %914 = vmatprep.subr.mxu0 0.0
    %915 = vmatpush1.msra.mxu0 %v889
    %916 = vmatprep.subr.mxu0 0.0
    %917 = vmatpush1.msra.mxu0 %v890
    %918 = vmatprep.subr.mxu0 0.0
    %919 = vmatpush1.msra.mxu0 %v891
    %920 = vmatprep.subr.mxu0 0.0
    %921 = vmatpush1.msra.mxu0 %v892
    %922 = vmatprep.subr.mxu0 0.0
    %923 = vmatpush1.msra.mxu0 %v893
    %924 = vmatprep.subr.mxu0 0.0
    %925 = vmatpush1.msra.mxu0 %v894
    %926 = vmatprep.subr.mxu0 0.0
    %927 = vmatpush1.msra.mxu0 %v895
    %928 = vmatprep.subr.mxu0 0.0
    %929 = vmatpush1.msra.mxu0 %v896
    %930 = vmatprep.subr.mxu0 0.0
    %931 = vmatpush1.msra.mxu0 %v897
    %932 = vmatprep.subr.mxu0 0.0
    %933 = vmatpush1.msra.mxu0 %v898
    %934 = vmatprep.subr.mxu0 0.0
    %935 = vmatpush1.msra.mxu0 %v899
    %936 = vmatprep.subr.mxu0 0.0
    %937 = vmatpush1.msra.mxu0 %v900
    %938 = vmatprep.subr.mxu0 0.0
    %939 = vmatpush1.msra.mxu0 %v901
    %940 = vmatprep.subr.mxu0 0.0
    %941 = vmatpush1.msra.mxu0 %v902
    %942 = vmatprep.subr.mxu0 0.0
    %943 = vmatpush1.msra.mxu0 %v903
    %944 = vmatprep.subr.mxu0 0.0
    %945 = vmatpush1.msra.mxu0 0.0
    %946 = vmatprep.subr.mxu0 0.0
    %947 = vmatpush1.msra.mxu0 0.0
    %948 = vmatprep.subr.mxu0 0.0
    %949 = vmatpush1.msra.mxu0 0.0
    %950 = vmatprep.subr.mxu0 0.0
    %951 = vmatpush1.msra.mxu0 0.0
    %952 = vmatprep.subr.mxu0 0.0
    %953 = vmatpush1.msra.mxu0 0.0
    %954 = vmatprep.subr.mxu0 0.0
    %955 = vmatpush1.msra.mxu0 0.0
    %956 = vmatprep.subr.mxu0 0.0
    %957 = vmatpush1.msra.mxu0 0.0
    %958 = vmatprep.subr.mxu0 0.0
    %959 = vmatpush1.msra.mxu0 0.0
    %960 = vmatprep.subr.mxu0 0.0
    %961 = vmatpush1.msra.mxu0 0.0
    %962 = vmatprep.subr.mxu0 0.0
    %963 = vmatpush1.msra.mxu0 0.0
    %964 = vmatprep.subr.mxu0 0.0
    %965 = vmatpush1.msra.mxu0 0.0
    %966 = vmatprep.subr.mxu0 0.0
    %967 = vmatpush1.msra.mxu0 0.0
    %968 = vmatprep.subr.mxu0 0.0
    %969 = vmatpush1.msra.mxu0 0.0
    %970 = vmatprep.subr.mxu0 0.0
    %971 = vmatpush1.msra.mxu0 0.0
    %972 = vmatprep.subr.mxu0 0.0
    %973 = vmatpush1.msra.mxu0 0.0
    %974 = vmatprep.subr.mxu0 0.0
    %975 = vmatpush1.msra.mxu0 0.0
    %976 = vmatprep.mubr.f32.mxu0 0.0
    %977 = vmatmul.mubr.f32.gmra.mrb[0].mxu0 %v791
    %v978 = vpop.f32.mrb[0].mxu0
    %v979 = vadd.f32 %v910, %v978
    %v980 = vpop.f32.mrb[0].mxu0
    %981 = vdwg.mxu0
    %v982 = vmax.f32 %v884, 0.0
    %v983 = vmax.f32 %v979, 0.0
    %v984 = vld [vmem:[#allocation10] sm:$0xff]
    %v985 = vld [vmem:[#allocation10 + $0x8] sm:$0xff]
    %v986 = vld [vmem:[#allocation10 + $0x10] sm:$0xff]
    %v987 = vld [vmem:[#allocation10 + $0x18] sm:$0xff]
    %v988 = vld [vmem:[#allocation10 + $0x20] sm:$0xff]
    %v989 = vld [vmem:[#allocation10 + $0x28] sm:$0xff]
    %v990 = vld [vmem:[#allocation10 + $0x30] sm:$0xff]
    %v991 = vld [vmem:[#allocation10 + $0x38] sm:$0xff]
    %v992 = vld [vmem:[#allocation10 + $0x40] sm:$0xff]
    %v993 = vld [vmem:[#allocation10 + $0x48] sm:$0xff]
    %v994 = vld [vmem:[#allocation10 + $0x50] sm:$0xff]
    %v995 = vld [vmem:[#allocation10 + $0x58] sm:$0xff]
    %v996 = vld [vmem:[#allocation10 + $0x60] sm:$0xff]
    %v997 = vld [vmem:[#allocation10 + $0x68] sm:$0xff]
    %v998 = vld [vmem:[#allocation10 + $0x70] sm:$0xff]
    %v999 = vld [vmem:[#allocation10 + $0x78] sm:$0xff]
    %v1000 = vld [vmem:[#allocation10 + $0x80] sm:$0xff]
    %v1001 = vld [vmem:[#allocation10 + $0x88] sm:$0xff]
    %v1002 = vld [vmem:[#allocation10 + $0x90] sm:$0xff]
    %v1003 = vld [vmem:[#allocation10 + $0x98] sm:$0xff]
    %v1004 = vld [vmem:[#allocation10 + $0xa0] sm:$0xff]
    %v1005 = vld [vmem:[#allocation10 + $0xa8] sm:$0xff]
    %v1006 = vld [vmem:[#allocation10 + $0xb0] sm:$0xff]
    %v1007 = vld [vmem:[#allocation10 + $0xb8] sm:$0xff]
    %v1008 = vld [vmem:[#allocation10 + $0xc0] sm:$0xff]
    %v1009 = vld [vmem:[#allocation10 + $0xc8] sm:$0xff]
    %v1010 = vld [vmem:[#allocation10 + $0xd0] sm:$0xff]
    %v1011 = vld [vmem:[#allocation10 + $0xd8] sm:$0xff]
    %v1012 = vld [vmem:[#allocation10 + $0xe0] sm:$0xff]
    %v1013 = vld [vmem:[#allocation10 + $0xe8] sm:$0xff]
    %v1014 = vld [vmem:[#allocation10 + $0xf0] sm:$0xff]
    %v1015 = vld [vmem:[#allocation10 + $0xf8] sm:$0xff]
    %v1016 = vld [vmem:[%s8] sm:$0x1]
    %v1018 = vlaneseq
    %v1019 = vshrl.u32 %v1018, 7
    %v1020 = vsub.s32 0, %v1019
    %v1021 = vrot.slane %v1016, %v1020
    %1023 = vmatprep.subr.mxu0 0.0
    %1024 = vmatpush1.msra.mxu0 %v984
    %1025 = vmatprep.subr.mxu0 0.0
    %1026 = vmatpush1.msra.mxu0 %v985
    %1027 = vmatprep.subr.mxu0 0.0
    %1028 = vmatpush1.msra.mxu0 %v986
    %1029 = vmatprep.subr.mxu0 0.0
    %1030 = vmatpush1.msra.mxu0 %v987
    %1031 = vmatprep.subr.mxu0 0.0
    %1032 = vmatpush1.msra.mxu0 %v988
    %1033 = vmatprep.subr.mxu0 0.0
    %1034 = vmatpush1.msra.mxu0 %v989
    %1035 = vmatprep.subr.mxu0 0.0
    %1036 = vmatpush1.msra.mxu0 %v990
    %1037 = vmatprep.subr.mxu0 0.0
    %1038 = vmatpush1.msra.mxu0 %v991
    %1039 = vmatprep.subr.mxu0 0.0
    %1040 = vmatpush1.msra.mxu0 %v992
    %1041 = vmatprep.subr.mxu0 0.0
    %1042 = vmatpush1.msra.mxu0 %v993
    %1043 = vmatprep.subr.mxu0 0.0
    %1044 = vmatpush1.msra.mxu0 %v994
    %1045 = vmatprep.subr.mxu0 0.0
    %1046 = vmatpush1.msra.mxu0 %v995
    %1047 = vmatprep.subr.mxu0 0.0
    %1048 = vmatpush1.msra.mxu0 %v996
    %1049 = vmatprep.subr.mxu0 0.0
    %1050 = vmatpush1.msra.mxu0 %v997
    %1051 = vmatprep.subr.mxu0 0.0
    %1052 = vmatpush1.msra.mxu0 %v998
    %1053 = vmatprep.subr.mxu0 0.0
    %1054 = vmatpush1.msra.mxu0 %v999
    %1055 = vmatprep.subr.mxu0 0.0
    %1056 = vmatpush1.msra.mxu0 %v1000
    %1057 = vmatprep.subr.mxu0 0.0
    %1058 = vmatpush1.msra.mxu0 %v1001
    %1059 = vmatprep.subr.mxu0 0.0
    %1060 = vmatpush1.msra.mxu0 %v1002
    %1061 = vmatprep.subr.mxu0 0.0
    %1062 = vmatpush1.msra.mxu0 %v1003
    %1063 = vmatprep.subr.mxu0 0.0
    %1064 = vmatpush1.msra.mxu0 %v1004
    %1065 = vmatprep.subr.mxu0 0.0
    %1066 = vmatpush1.msra.mxu0 %v1005
    %1067 = vmatprep.subr.mxu0 0.0
    %1068 = vmatpush1.msra.mxu0 %v1006
    %1069 = vmatprep.subr.mxu0 0.0
    %1070 = vmatpush1.msra.mxu0 %v1007
    %1071 = vmatprep.subr.mxu0 0.0
    %1072 = vmatpush1.msra.mxu0 %v1008
    %1073 = vmatprep.subr.mxu0 0.0
    %1074 = vmatpush1.msra.mxu0 %v1009
    %1075 = vmatprep.subr.mxu0 0.0
    %1076 = vmatpush1.msra.mxu0 %v1010
    %1077 = vmatprep.subr.mxu0 0.0
    %1078 = vmatpush1.msra.mxu0 %v1011
    %1079 = vmatprep.subr.mxu0 0.0
    %1080 = vmatpush1.msra.mxu0 %v1012
    %1081 = vmatprep.subr.mxu0 0.0
    %1082 = vmatpush1.msra.mxu0 %v1013
    %1083 = vmatprep.subr.mxu0 0.0
    %1084 = vmatpush1.msra.mxu0 %v1014
    %1085 = vmatprep.subr.mxu0 0.0
    %1086 = vmatpush1.msra.mxu0 %v1015
    %1087 = vmatprep.mubr.f32.mxu0 %v983
    %1088 = vmatmul.mubr.f32.gmra.mrb[0].mxu0 %v982
    %v1089 = vpop.f32.mrb[0].mxu0
    %v1090 = vadd.f32 %v1021, %v1089
    %v1091 = vpop.f32.mrb[0].mxu0
    %1092 = vdwg.mxu0
    %v1093 = vlaneseq
    %v1094 = vand.u32 %v1093, 127
    %vm1095 = vcmp.eq.s32.totalorder %v1094, 23
    %v1096 = vtanh.pop %v1090
    %v1097 = vsel %vm1095, %v1096, %v1090
    %1098 = vst [vmem:[%s9] sm:$0xff] %v1097
    // Predicated region
    $region58: #{neural_network2_forward.1} parent=1 // pred_check
      _
    $region59: #{neural_network2_forward.1} parent=1 // pred_check_branch
      %1100 = sbr.rel (0) target = $region61
    $region60: #{neural_network2_forward.1} parent=1 // pred_region
      _
    $region61: #{neural_network2_forward.1} parent=1 // pred_fallthru
      _
    // Predicated region
    $region62: #{neural_network2_forward.1} parent=1 // pred_check
      _
    $region63: #{neural_network2_forward.1} parent=1 // pred_check_branch
      %1102 = sbr.rel (0) target = $region65
    $region64: #{neural_network2_forward.1} parent=1 // pred_region
      _
    $region65: #{neural_network2_forward.1} parent=1 // pred_fallthru
      _
    %1103 = vsyncpa [#allocation4], 1
    %1104 = vsyncpa [#allocation6], 1
    %1105 = vsyncpa [#allocation9], 1

</llo_original>
